<compile_context>
chip_gen: v5e
topology: v5e:2x2
jax: 0.10.0
libtpu: 0.0.40
codegen_flags: <defaults>
</compile_context>

<pallas_src>
import jax
import jax.numpy as jnp
from jax.experimental import pallas as pl
from jax.experimental.pallas import tpu as pltpu


def _fused_se_conv1x1_kernel(x_ref, s_ref, w_ref, o_ref):
    # x_ref: (Cin, HW) f32   s_ref: (1, Cin) f32
    # w_ref: (Cout, Cin) bf16   o_ref: (Cout, HW) f32
    # Lane-dense sigmoid on the EUP (f32), quantized once to bf16.
    gate = jax.nn.sigmoid(s_ref[...]).astype(jnp.bfloat16)        # (1, Cin)
    # Fold the per-input-channel gate into the weight rows: bf16 VPU
    # broadcast-multiply along sublanes (lane-aligned, no cross-lane moves).
    w_gated = w_ref[...] * gate                                    # (Cout, Cin) bf16
    x_bf16 = x_ref[...].astype(jnp.bfloat16)                       # (Cin, HW)
    # 1x1 conv == matmul over Cin on the MXU, f32 accumulation.
    o_ref[...] = jax.lax.dot_general(
        w_gated, x_bf16,
        dimension_numbers=(((1,), (0,)), ((), ())),                # contract Cin
        preferred_element_type=jnp.float32,
    ).astype(o_ref.dtype)


@jax.jit
def sigmoid_mul_conv1x1(x481, x485, weight_bf16):
    """x481: (1, Cin, H, W) f32; x485: (1, Cin, 1, 1) f32;
    weight_bf16: (Cout, Cin, 1, 1) bf16 (pre-cast once at model load)
    -> (1, Cout, H, W) f32"""
    N, Cin, H, W = x481.shape
    Cout = weight_bf16.shape[0]
    HW = H * W
    assert N == 1, "kernel written for N=1 (matches the reference module)"

    # All wrapper-side layout changes are free contiguous reshapes.
    x_mat = x481.reshape(Cin, HW)                 # (1536, 49)
    s_mat = x485.reshape(1, Cin)                  # (1, 1536)
    w_mat = weight_bf16.reshape(Cout, Cin)        # (256, 1536) bf16

    cost = pl.CostEstimate(
        flops=2 * HW * Cin * Cout,
        transcendentals=Cin,
        bytes_accessed=(x_mat.size * 4 + s_mat.size * 4
                        + w_mat.size * 2 + Cout * HW * 4),
    )

    # Single grid step: whole problem fits comfortably in VMEM on v5e/v6e/v7x,
    # and the kernel is HBM/overhead-bound so extra grid steps only add cost.
    out_mat = pl.pallas_call(
        _fused_se_conv1x1_kernel,
        out_shape=jax.ShapeDtypeStruct((Cout, HW), jnp.float32),
        grid=(1,),
        in_specs=[
            pl.BlockSpec((Cin, HW), lambda i: (0, 0)),    # activations
            pl.BlockSpec((1, Cin), lambda i: (0, 0)),     # SE logits
            pl.BlockSpec((Cout, Cin), lambda i: (0, 0)),  # weight (bf16)
        ],
        out_specs=pl.BlockSpec((Cout, HW), lambda i: (0, 0)),
        compiler_params=pltpu.CompilerParams(
            dimension_semantics=("arbitrary",)),
        cost_estimate=cost,
    )(x_mat, s_mat, w_mat)

    # (Cout, HW) -> (1, Cout, H, W): free contiguous reshape.
    return out_mat.reshape(N, Cout, H, W)


def reference(x481, x485, weight_f32):
    gate = jax.nn.sigmoid(x485)                               # (1, Cin, 1, 1)
    xg = gate * x481                                          # (1, Cin, H, W)
    # 1x1 conv == einsum over Cin
    return jnp.einsum("nchw,oc->nohw", xg, weight_f32[:, :, 0, 0])


if __name__ == "__main__":
    key = jax.random.PRNGKey(0)
    k1, k2, k3 = jax.random.split(key, 3)

    N, Cin, Cout, H, W = 1, 1536, 256, 7, 7
    x481 = jax.random.normal(k1, (N, Cin, H, W), dtype=jnp.float32)
    x485 = jax.random.normal(k2, (N, Cin, 1, 1), dtype=jnp.float32)
    # PyTorch-shaped conv weight (Cout, Cin, 1, 1).
    weight = jax.random.normal(k3, (Cout, Cin, 1, 1), dtype=jnp.float32) * 0.02
    # One-time weight preparation (done at model-load time, not per call):
    weight_bf16 = weight.astype(jnp.bfloat16)

    out = jax.block_until_ready(sigmoid_mul_conv1x1(x481, x485, weight_bf16))
    ref = jax.block_until_ready(reference(x481, x485, weight))

    assert out.shape == (N, Cout, H, W), out.shape
    # bf16 matmul path: tolerance loosened vs a pure-f32 reference.
    max_err = float(jnp.max(jnp.abs(out - ref)))
    assert jnp.allclose(out, ref, atol=3e-2, rtol=2e-2), max_err
    print("KERNEL_OK")
</pallas_src>

<mosaic_0001>
module attributes {stable_mosaic.version = 11 : i64} {
  func.func @_fused_se_conv1x1_kernel(%arg0: i32, %arg1: memref<1536x49xf32, #tpu.memory_space<vmem>>, %arg2: memref<1x1536xf32, #tpu.memory_space<vmem>>, %arg3: memref<256x1536xbf16, #tpu.memory_space<vmem>>, %arg4: memref<256x49xf32, #tpu.memory_space<vmem>>) attributes {dimension_semantics = [#tpu.dimension_semantics<arbitrary>], iteration_bounds = array<i64: 1>, scalar_prefetch = 0 : i64, scratch_operands = 0 : i64, tpu.core_type = #tpu.core_type<tc>, window_params = [{pipeline_mode = #tpu.pipeline_mode<synchronous>, transform_indices = @transform_0, window_bounds = array<i64: 1536, 49>}, {pipeline_mode = #tpu.pipeline_mode<synchronous>, transform_indices = @transform_1, window_bounds = array<i64: 1, 1536>}, {pipeline_mode = #tpu.pipeline_mode<synchronous>, transform_indices = @transform_2, window_bounds = array<i64: 256, 1536>}, {pipeline_mode = #tpu.pipeline_mode<synchronous>, transform_indices = @transform_3, window_bounds = array<i64: 256, 49>}]} {
    %c0 = arith.constant 0 : index
    %c0_0 = arith.constant 0 : index
    %0 = vector.load %arg2[%c0, %c0_0] : memref<1x1536xf32, #tpu.memory_space<vmem>>, vector<1x1536xf32>
    %1 = arith.negf %0 : vector<1x1536xf32>
    %2 = math.exp %1 : vector<1x1536xf32>
    %cst = arith.constant 1.000000e+00 : f32
    %3 = vector.broadcast %cst : f32 to vector<1x1536xf32>
    %4 = arith.addf %3, %2 : vector<1x1536xf32>
    %5 = arith.divf %3, %4 : vector<1x1536xf32>
    %6 = arith.truncf %5 : vector<1x1536xf32> to vector<1x1536xbf16>
    %c0_1 = arith.constant 0 : index
    %c0_2 = arith.constant 0 : index
    %7 = vector.load %arg3[%c0_1, %c0_2] : memref<256x1536xbf16, #tpu.memory_space<vmem>>, vector<256x1536xbf16>
    %8 = vector.broadcast %6 : vector<1x1536xbf16> to vector<256x1536xbf16>
    %9 = arith.mulf %7, %8 : vector<256x1536xbf16>
    %c0_3 = arith.constant 0 : index
    %c0_4 = arith.constant 0 : index
    %10 = vector.load %arg1[%c0_3, %c0_4] : memref<1536x49xf32, #tpu.memory_space<vmem>>, vector<1536x49xf32>
    %11 = arith.truncf %10 : vector<1536x49xf32> to vector<1536x49xbf16>
    %cst_5 = arith.constant dense<0.000000e+00> : vector<256x49xf32>
    %12 = tpu.matmul %9, %11, %cst_5 {dimension_numbers = #tpu.dot_dimension_numbers<[1], [0], [0], [1], [0, 0, 1, 1], [], []>} : vector<256x1536xbf16>, vector<1536x49xbf16>, vector<256x49xf32> -> vector<256x49xf32>
    %c0_6 = arith.constant 0 : index
    %c0_7 = arith.constant 0 : index
    %13 = vector.load %arg4[%c0_6, %c0_7] : memref<256x49xf32, #tpu.memory_space<vmem>>, vector<256x49xf32>
    tpu.vector_store %arg4[%c0_6, %c0_7], %12 {strides = array<i32>} : memref<256x49xf32, #tpu.memory_space<vmem>>, vector<256x49xf32>,
    return
  }
  func.func @transform_0(%arg0: i32) -> (i32, i32) {
    %c0_i32 = arith.constant 0 : i32
    %c0_i32_0 = arith.constant 0 : i32
    %c0_i32_1 = arith.constant 0 : i32
    return %c0_i32, %c0_i32_0 : i32, i32
  }
  func.func @transform_1(%arg0: i32) -> (i32, i32) {
    %c0_i32 = arith.constant 0 : i32
    %c0_i32_0 = arith.constant 0 : i32
    %c0_i32_1 = arith.constant 0 : i32
    return %c0_i32, %c0_i32_0 : i32, i32
  }
  func.func @transform_2(%arg0: i32) -> (i32, i32) {
    %c0_i32 = arith.constant 0 : i32
    %c0_i32_0 = arith.constant 0 : i32
    %c0_i32_1 = arith.constant 0 : i32
    return %c0_i32, %c0_i32_0 : i32, i32
  }
  func.func @transform_3(%arg0: i32) -> (i32, i32) {
    %c0_i32 = arith.constant 0 : i32
    %c0_i32_0 = arith.constant 0 : i32
    %c0_i32_1 = arith.constant 0 : i32
    return %c0_i32, %c0_i32_0 : i32, i32
  }
}

</mosaic_0001>

<llo_original>
// kernel: sigmoid_mul_conv1x1.1
$region0: #{sigmoid_mul_conv1x1.1}
  #allocation0 [shape = 'u32[]', space=smem, size = 0x4, offset = 0x4, fixed_abs, tag = 'smem constant byte address 0x4 - core index']
  #allocation1 [shape = 'u32[72,128]{1,0:T(1,128)}', space=vmem, size = 0x9000, scoped, tag = 'internal scratch']
  %s0 = inlined_call_operand.vmem [shape: f32[1536,49], index: 0, kind: input, shape index: {}]
  %s1 = inlined_call_operand.vmem [shape: f32[1,1536], index: 1, kind: input, shape index: {}]
  %s2 = inlined_call_operand.vmem [shape: bf16[256,1536], index: 2, kind: input, shape index: {}]
  %s3 = inlined_call_operand.vmem [shape: f32[256,49], index: 3, kind: output, shape index: {}]
  %s4 = sld [smem:[#allocation0]]
  $region22: #{sigmoid_mul_conv1x1.1} parent=0
    _
  %s6 = ssub.s32 1, %s4
  %s7 = scalar_select 0, %s6, %s4
  // Predicated region
  $region2: #{sigmoid_mul_conv1x1.1} parent=0 // pred_check
    _
  $region3: #{sigmoid_mul_conv1x1.1} parent=0 // pred_check_branch
    %9 = sbr.rel (0) target = $region5
  $region4: #{sigmoid_mul_conv1x1.1} parent=0 // pred_region
    _
  $region5: #{sigmoid_mul_conv1x1.1} parent=0 // pred_fallthru
    _
  // Predicated region
  $region6: #{sigmoid_mul_conv1x1.1} parent=0 // pred_check
    _
  $region7: #{sigmoid_mul_conv1x1.1} parent=0 // pred_check_branch
    %11 = sbr.rel (0) target = $region9
  $region8: #{sigmoid_mul_conv1x1.1} parent=0 // pred_region
    _
  $region9: #{sigmoid_mul_conv1x1.1} parent=0 // pred_fallthru
    _
  // Predicated region
  $region10: #{sigmoid_mul_conv1x1.1} parent=0 // pred_check
    _
  $region11: #{sigmoid_mul_conv1x1.1} parent=0 // pred_check_branch
    %13 = sbr.rel (0) target = $region13
  $region12: #{sigmoid_mul_conv1x1.1} parent=0 // pred_region
    _
  $region13: #{sigmoid_mul_conv1x1.1} parent=0 // pred_fallthru
    _
  %v14 = vld [vmem:[%s1] sm:$0xff]
  %v15 = vld [vmem:[%s1 + $0x8] sm:$0xf]
  %v16 = vxor.u32 %v14, 2147483648
  %v17 = vxor.u32 %v15, 2147483648
  %v18 = vmul.f32 %v16, 1.442695
  %v19 = vpow.pop %v18
  %v20 = vmul.f32 %v17, 1.442695
  %v21 = vpow.pop %v20
  %v22 = vadd.f32 %v19, 1.0
  %v23 = vadd.f32 %v21, 1.0
  %v24 = vrcp.pop %v22
  %v25 = vmul.f32 %v22, %v24
  %v26 = vsub.f32 1.0, %v25
  %v27 = vmul.f32 %v24, %v26
  %v28 = vadd.f32 %v24, %v27
  %vm29 = vweird.f32 %v22
  %vm30 = vweird.f32 %v24
  %vm31 = vmor %vm29, %vm30
  %v32 = vsel %vm31, %v24, %v28
  %v33 = vand.u32 2147483647, %v22
  %vm34 = vcmp.eq.f32.partialorder %v33, 8.507059e+37
  %v35 = vand.u32 %v22, 2147483648
  %v36 = vor.u32 1.1754944e-38, %v35
  %v37 = vsel %vm34, %v36, %v32
  %v38 = vmul.f32 1.0, %v37
  %v39 = vrcp.pop %v23
  %v40 = vmul.f32 %v23, %v39
  %v41 = vsub.f32 1.0, %v40
  %v42 = vmul.f32 %v39, %v41
  %v43 = vadd.f32 %v39, %v42
  %vm44 = vweird.f32 %v23
  %vm45 = vweird.f32 %v39
  %vm46 = vmor %vm44, %vm45
  %v47 = vsel %vm46, %v39, %v43
  %v48 = vand.u32 2147483647, %v23
  %vm49 = vcmp.eq.f32.partialorder %v48, 8.507059e+37
  %v50 = vand.u32 %v23, 2147483648
  %v51 = vor.u32 1.1754944e-38, %v50
  %v52 = vsel %vm49, %v51, %v47
  %v53 = vmul.f32 1.0, %v52
  %v56 = vperm.slane %v38, 0
  %v57 = vperm.slane %v38, 1
  %v58 = vperm.slane %v38, 2
  %v59 = vperm.slane %v38, 3
  %v60 = vperm.slane %v38, 4
  %v61 = vperm.slane %v38, 5
  %v62 = vperm.slane %v38, 6
  %v63 = vperm.slane %v38, 7
  %v64 = vperm.slane %v53, 0
  %v65 = vperm.slane %v53, 1
  %v66 = vperm.slane %v53, 2
  %v67 = vperm.slane %v53, 3
  %v80 = vpack.c.bf16 %v57, %v56
  %v81 = vpack.c.bf16 %v59, %v58
  %v82 = vpack.c.bf16 %v61, %v60
  %v83 = vpack.c.bf16 %v63, %v62
  %v84 = vpack.c.bf16 %v65, %v64
  %v85 = vpack.c.bf16 %v67, %v66
  %v86 = vld [vmem:[%s2] sm:$0xff]
  %v87 = vld [vmem:[%s2 + $0x8] sm:$0xff]
  %v88 = vld [vmem:[%s2 + $0x10] sm:$0xff]
  %v89 = vld [vmem:[%s2 + $0x18] sm:$0xff]
  %v90 = vld [vmem:[%s2 + $0x20] sm:$0xff]
  %v91 = vld [vmem:[%s2 + $0x28] sm:$0xff]
  %v92 = vld [vmem:[%s2 + $0x30] sm:$0xff]
  %v93 = vld [vmem:[%s2 + $0x38] sm:$0xff]
  %v94 = vld [vmem:[%s2 + $0x40] sm:$0xff]
  %v95 = vld [vmem:[%s2 + $0x48] sm:$0xff]
  %v96 = vld [vmem:[%s2 + $0x50] sm:$0xff]
  %v97 = vld [vmem:[%s2 + $0x58] sm:$0xff]
  %v98 = vld [vmem:[%s2 + $0x60] sm:$0xff]
  %v99 = vld [vmem:[%s2 + $0x68] sm:$0xff]
  %v100 = vld [vmem:[%s2 + $0x70] sm:$0xff]
  %v101 = vld [vmem:[%s2 + $0x78] sm:$0xff]
  %v102 = vld [vmem:[%s2 + $0x80] sm:$0xff]
  %v103 = vld [vmem:[%s2 + $0x88] sm:$0xff]
  %v104 = vld [vmem:[%s2 + $0x90] sm:$0xff]
  %v105 = vld [vmem:[%s2 + $0x98] sm:$0xff]
  %v106 = vld [vmem:[%s2 + $0xa0] sm:$0xff]
  %v107 = vld [vmem:[%s2 + $0xa8] sm:$0xff]
  %v108 = vld [vmem:[%s2 + $0xb0] sm:$0xff]
  %v109 = vld [vmem:[%s2 + $0xb8] sm:$0xff]
  %v110 = vld [vmem:[%s2 + $0xc0] sm:$0xff]
  %v111 = vld [vmem:[%s2 + $0xc8] sm:$0xff]
  %v112 = vld [vmem:[%s2 + $0xd0] sm:$0xff]
  %v113 = vld [vmem:[%s2 + $0xd8] sm:$0xff]
  %v114 = vld [vmem:[%s2 + $0xe0] sm:$0xff]
  %v115 = vld [vmem:[%s2 + $0xe8] sm:$0xff]
  %v116 = vld [vmem:[%s2 + $0xf0] sm:$0xff]
  %v117 = vld [vmem:[%s2 + $0xf8] sm:$0xff]
  %v118 = vld [vmem:[%s2 + $0x100] sm:$0xff]
  %v119 = vld [vmem:[%s2 + $0x108] sm:$0xff]
  %v120 = vld [vmem:[%s2 + $0x110] sm:$0xff]
  %v121 = vld [vmem:[%s2 + $0x118] sm:$0xff]
  %v122 = vld [vmem:[%s2 + $0x120] sm:$0xff]
  %v123 = vld [vmem:[%s2 + $0x128] sm:$0xff]
  %v124 = vld [vmem:[%s2 + $0x130] sm:$0xff]
  %v125 = vld [vmem:[%s2 + $0x138] sm:$0xff]
  %v126 = vld [vmem:[%s2 + $0x140] sm:$0xff]
  %v127 = vld [vmem:[%s2 + $0x148] sm:$0xff]
  %v128 = vld [vmem:[%s2 + $0x150] sm:$0xff]
  %v129 = vld [vmem:[%s2 + $0x158] sm:$0xff]
  %v130 = vld [vmem:[%s2 + $0x160] sm:$0xff]
  %v131 = vld [vmem:[%s2 + $0x168] sm:$0xff]
  %v132 = vld [vmem:[%s2 + $0x170] sm:$0xff]
  %v133 = vld [vmem:[%s2 + $0x178] sm:$0xff]
  %v134 = vld [vmem:[%s2 + $0x180] sm:$0xff]
  %v135 = vld [vmem:[%s2 + $0x188] sm:$0xff]
  %v136 = vld [vmem:[%s2 + $0x190] sm:$0xff]
  %v137 = vld [vmem:[%s2 + $0x198] sm:$0xff]
  %v138 = vld [vmem:[%s2 + $0x1a0] sm:$0xff]
  %v139 = vld [vmem:[%s2 + $0x1a8] sm:$0xff]
  %v140 = vld [vmem:[%s2 + $0x1b0] sm:$0xff]
  %v141 = vld [vmem:[%s2 + $0x1b8] sm:$0xff]
  %v142 = vld [vmem:[%s2 + $0x1c0] sm:$0xff]
  %v143 = vld [vmem:[%s2 + $0x1c8] sm:$0xff]
  %v144 = vld [vmem:[%s2 + $0x1d0] sm:$0xff]
  %v145 = vld [vmem:[%s2 + $0x1d8] sm:$0xff]
  %v146 = vld [vmem:[%s2 + $0x1e0] sm:$0xff]
  %v147 = vld [vmem:[%s2 + $0x1e8] sm:$0xff]
  %v148 = vld [vmem:[%s2 + $0x1f0] sm:$0xff]
  %v149 = vld [vmem:[%s2 + $0x1f8] sm:$0xff]
  %v150 = vld [vmem:[%s2 + $0x200] sm:$0xff]
  %v151 = vld [vmem:[%s2 + $0x208] sm:$0xff]
  %v152 = vld [vmem:[%s2 + $0x210] sm:$0xff]
  %v153 = vld [vmem:[%s2 + $0x218] sm:$0xff]
  %v154 = vld [vmem:[%s2 + $0x220] sm:$0xff]
  %v155 = vld [vmem:[%s2 + $0x228] sm:$0xff]
  %v156 = vld [vmem:[%s2 + $0x230] sm:$0xff]
  %v157 = vld [vmem:[%s2 + $0x238] sm:$0xff]
  %v158 = vld [vmem:[%s2 + $0x240] sm:$0xff]
  %v159 = vld [vmem:[%s2 + $0x248] sm:$0xff]
  %v160 = vld [vmem:[%s2 + $0x250] sm:$0xff]
  %v161 = vld [vmem:[%s2 + $0x258] sm:$0xff]
  %v162 = vld [vmem:[%s2 + $0x260] sm:$0xff]
  %v163 = vld [vmem:[%s2 + $0x268] sm:$0xff]
  %v164 = vld [vmem:[%s2 + $0x270] sm:$0xff]
  %v165 = vld [vmem:[%s2 + $0x278] sm:$0xff]
  %v166 = vld [vmem:[%s2 + $0x280] sm:$0xff]
  %v167 = vld [vmem:[%s2 + $0x288] sm:$0xff]
  %v168 = vld [vmem:[%s2 + $0x290] sm:$0xff]
  %v169 = vld [vmem:[%s2 + $0x298] sm:$0xff]
  %v170 = vld [vmem:[%s2 + $0x2a0] sm:$0xff]
  %v171 = vld [vmem:[%s2 + $0x2a8] sm:$0xff]
  %v172 = vld [vmem:[%s2 + $0x2b0] sm:$0xff]
  %v173 = vld [vmem:[%s2 + $0x2b8] sm:$0xff]
  %v174 = vld [vmem:[%s2 + $0x2c0] sm:$0xff]
  %v175 = vld [vmem:[%s2 + $0x2c8] sm:$0xff]
  %v176 = vld [vmem:[%s2 + $0x2d0] sm:$0xff]
  %v177 = vld [vmem:[%s2 + $0x2d8] sm:$0xff]
  %v178 = vld [vmem:[%s2 + $0x2e0] sm:$0xff]
  %v179 = vld [vmem:[%s2 + $0x2e8] sm:$0xff]
  %v180 = vld [vmem:[%s2 + $0x2f0] sm:$0xff]
  %v181 = vld [vmem:[%s2 + $0x2f8] sm:$0xff]
  %v182 = vld [vmem:[%s2 + $0x300] sm:$0xff]
  %v183 = vld [vmem:[%s2 + $0x308] sm:$0xff]
  %v184 = vld [vmem:[%s2 + $0x310] sm:$0xff]
  %v185 = vld [vmem:[%s2 + $0x318] sm:$0xff]
  %v186 = vld [vmem:[%s2 + $0x320] sm:$0xff]
  %v187 = vld [vmem:[%s2 + $0x328] sm:$0xff]
  %v188 = vld [vmem:[%s2 + $0x330] sm:$0xff]
  %v189 = vld [vmem:[%s2 + $0x338] sm:$0xff]
  %v190 = vld [vmem:[%s2 + $0x340] sm:$0xff]
  %v191 = vld [vmem:[%s2 + $0x348] sm:$0xff]
  %v192 = vld [vmem:[%s2 + $0x350] sm:$0xff]
  %v193 = vld [vmem:[%s2 + $0x358] sm:$0xff]
  %v194 = vld [vmem:[%s2 + $0x360] sm:$0xff]
  %v195 = vld [vmem:[%s2 + $0x368] sm:$0xff]
  %v196 = vld [vmem:[%s2 + $0x370] sm:$0xff]
  %v197 = vld [vmem:[%s2 + $0x378] sm:$0xff]
  %v198 = vld [vmem:[%s2 + $0x380] sm:$0xff]
  %v199 = vld [vmem:[%s2 + $0x388] sm:$0xff]
  %v200 = vld [vmem:[%s2 + $0x390] sm:$0xff]
  %v201 = vld [vmem:[%s2 + $0x398] sm:$0xff]
  %v202 = vld [vmem:[%s2 + $0x3a0] sm:$0xff]
  %v203 = vld [vmem:[%s2 + $0x3a8] sm:$0xff]
  %v204 = vld [vmem:[%s2 + $0x3b0] sm:$0xff]
  %v205 = vld [vmem:[%s2 + $0x3b8] sm:$0xff]
  %v206 = vld [vmem:[%s2 + $0x3c0] sm:$0xff]
  %v207 = vld [vmem:[%s2 + $0x3c8] sm:$0xff]
  %v208 = vld [vmem:[%s2 + $0x3d0] sm:$0xff]
  %v209 = vld [vmem:[%s2 + $0x3d8] sm:$0xff]
  %v210 = vld [vmem:[%s2 + $0x3e0] sm:$0xff]
  %v211 = vld [vmem:[%s2 + $0x3e8] sm:$0xff]
  %v212 = vld [vmem:[%s2 + $0x3f0] sm:$0xff]
  %v213 = vld [vmem:[%s2 + $0x3f8] sm:$0xff]
  %v214 = vld [vmem:[%s2 + $0x400] sm:$0xff]
  %v215 = vld [vmem:[%s2 + $0x408] sm:$0xff]
  %v216 = vld [vmem:[%s2 + $0x410] sm:$0xff]
  %v217 = vld [vmem:[%s2 + $0x418] sm:$0xff]
  %v218 = vld [vmem:[%s2 + $0x420] sm:$0xff]
  %v219 = vld [vmem:[%s2 + $0x428] sm:$0xff]
  %v220 = vld [vmem:[%s2 + $0x430] sm:$0xff]
  %v221 = vld [vmem:[%s2 + $0x438] sm:$0xff]
  %v222 = vld [vmem:[%s2 + $0x440] sm:$0xff]
  %v223 = vld [vmem:[%s2 + $0x448] sm:$0xff]
  %v224 = vld [vmem:[%s2 + $0x450] sm:$0xff]
  %v225 = vld [vmem:[%s2 + $0x458] sm:$0xff]
  %v226 = vld [vmem:[%s2 + $0x460] sm:$0xff]
  %v227 = vld [vmem:[%s2 + $0x468] sm:$0xff]
  %v228 = vld [vmem:[%s2 + $0x470] sm:$0xff]
  %v229 = vld [vmem:[%s2 + $0x478] sm:$0xff]
  %v230 = vld [vmem:[%s2 + $0x480] sm:$0xff]
  %v231 = vld [vmem:[%s2 + $0x488] sm:$0xff]
  %v232 = vld [vmem:[%s2 + $0x490] sm:$0xff]
  %v233 = vld [vmem:[%s2 + $0x498] sm:$0xff]
  %v234 = vld [vmem:[%s2 + $0x4a0] sm:$0xff]
  %v235 = vld [vmem:[%s2 + $0x4a8] sm:$0xff]
  %v236 = vld [vmem:[%s2 + $0x4b0] sm:$0xff]
  %v237 = vld [vmem:[%s2 + $0x4b8] sm:$0xff]
  %v238 = vld [vmem:[%s2 + $0x4c0] sm:$0xff]
  %v239 = vld [vmem:[%s2 + $0x4c8] sm:$0xff]
  %v240 = vld [vmem:[%s2 + $0x4d0] sm:$0xff]
  %v241 = vld [vmem:[%s2 + $0x4d8] sm:$0xff]
  %v242 = vld [vmem:[%s2 + $0x4e0] sm:$0xff]
  %v243 = vld [vmem:[%s2 + $0x4e8] sm:$0xff]
  %v244 = vld [vmem:[%s2 + $0x4f0] sm:$0xff]
  %v245 = vld [vmem:[%s2 + $0x4f8] sm:$0xff]
  %v246 = vld [vmem:[%s2 + $0x500] sm:$0xff]
  %v247 = vld [vmem:[%s2 + $0x508] sm:$0xff]
  %v248 = vld [vmem:[%s2 + $0x510] sm:$0xff]
  %v249 = vld [vmem:[%s2 + $0x518] sm:$0xff]
  %v250 = vld [vmem:[%s2 + $0x520] sm:$0xff]
  %v251 = vld [vmem:[%s2 + $0x528] sm:$0xff]
  %v252 = vld [vmem:[%s2 + $0x530] sm:$0xff]
  %v253 = vld [vmem:[%s2 + $0x538] sm:$0xff]
  %v254 = vld [vmem:[%s2 + $0x540] sm:$0xff]
  %v255 = vld [vmem:[%s2 + $0x548] sm:$0xff]
  %v256 = vld [vmem:[%s2 + $0x550] sm:$0xff]
  %v257 = vld [vmem:[%s2 + $0x558] sm:$0xff]
  %v258 = vld [vmem:[%s2 + $0x560] sm:$0xff]
  %v259 = vld [vmem:[%s2 + $0x568] sm:$0xff]
  %v260 = vld [vmem:[%s2 + $0x570] sm:$0xff]
  %v261 = vld [vmem:[%s2 + $0x578] sm:$0xff]
  %v262 = vld [vmem:[%s2 + $0x580] sm:$0xff]
  %v263 = vld [vmem:[%s2 + $0x588] sm:$0xff]
  %v264 = vld [vmem:[%s2 + $0x590] sm:$0xff]
  %v265 = vld [vmem:[%s2 + $0x598] sm:$0xff]
  %v266 = vld [vmem:[%s2 + $0x5a0] sm:$0xff]
  %v267 = vld [vmem:[%s2 + $0x5a8] sm:$0xff]
  %v268 = vld [vmem:[%s2 + $0x5b0] sm:$0xff]
  %v269 = vld [vmem:[%s2 + $0x5b8] sm:$0xff]
  %v270 = vld [vmem:[%s2 + $0x5c0] sm:$0xff]
  %v271 = vld [vmem:[%s2 + $0x5c8] sm:$0xff]
  %v272 = vld [vmem:[%s2 + $0x5d0] sm:$0xff]
  %v273 = vld [vmem:[%s2 + $0x5d8] sm:$0xff]
  %v274 = vld [vmem:[%s2 + $0x5e0] sm:$0xff]
  %v275 = vld [vmem:[%s2 + $0x5e8] sm:$0xff]
  %v276 = vld [vmem:[%s2 + $0x5f0] sm:$0xff]
  %v277 = vld [vmem:[%s2 + $0x5f8] sm:$0xff]
  %v284 = vunpack.c.l.b16 %v80
  %v285 = vunpack.c.h.b16 %v80
  %v286 = vunpack.c.l.b16 %v81
  %v287 = vunpack.c.h.b16 %v81
  %v288 = vunpack.c.l.b16 %v82
  %v289 = vunpack.c.h.b16 %v82
  %v290 = vunpack.c.l.b16 %v83
  %v291 = vunpack.c.h.b16 %v83
  %v292 = vunpack.c.l.b16 %v84
  %v293 = vunpack.c.h.b16 %v84
  %v294 = vunpack.c.l.b16 %v85
  %v295 = vunpack.c.h.b16 %v85
  %v296 = vpack.c.b16 %v284, %v284
  %v297 = vpack.c.b16 %v285, %v285
  %v298 = vpack.c.b16 %v286, %v286
  %v299 = vpack.c.b16 %v287, %v287
  %v300 = vpack.c.b16 %v288, %v288
  %v301 = vpack.c.b16 %v289, %v289
  %v302 = vpack.c.b16 %v290, %v290
  %v303 = vpack.c.b16 %v291, %v291
  %v304 = vpack.c.b16 %v292, %v292
  %v305 = vpack.c.b16 %v293, %v293
  %v306 = vpack.c.b16 %v294, %v294
  %v307 = vpack.c.b16 %v295, %v295
  %v309 = vpack.i.b16 %v296, %v296
  %v311 = vperm.slane %v309, 0
  %v313 = vpack.i.b16 %v297, %v297
  %v315 = vperm.slane %v313, 0
  %v317 = vpack.i.b16 %v298, %v298
  %v319 = vperm.slane %v317, 0
  %v321 = vpack.i.b16 %v299, %v299
  %v323 = vperm.slane %v321, 0
  %v325 = vpack.i.b16 %v300, %v300
  %v327 = vperm.slane %v325, 0
  %v329 = vpack.i.b16 %v301, %v301
  %v331 = vperm.slane %v329, 0
  %v333 = vpack.i.b16 %v302, %v302
  %v335 = vperm.slane %v333, 0
  %v337 = vpack.i.b16 %v303, %v303
  %v339 = vperm.slane %v337, 0
  %v341 = vpack.i.b16 %v304, %v304
  %v343 = vperm.slane %v341, 0
  %v345 = vpack.i.b16 %v305, %v305
  %v347 = vperm.slane %v345, 0
  %v349 = vpack.i.b16 %v306, %v306
  %v351 = vperm.slane %v349, 0
  %v353 = vpack.i.b16 %v307, %v307
  %v355 = vperm.slane %v353, 0
  %v356 = vunpack.c.l.bf16 %v86
  %v357 = vunpack.c.h.bf16 %v86
  %v358 = vunpack.c.l.bf16 %v87
  %v359 = vunpack.c.h.bf16 %v87
  %v360 = vunpack.c.l.bf16 %v88
  %v361 = vunpack.c.h.bf16 %v88
  %v362 = vunpack.c.l.bf16 %v89
  %v363 = vunpack.c.h.bf16 %v89
  %v364 = vunpack.c.l.bf16 %v90
  %v365 = vunpack.c.h.bf16 %v90
  %v366 = vunpack.c.l.bf16 %v91
  %v367 = vunpack.c.h.bf16 %v91
  %v368 = vunpack.c.l.bf16 %v92
  %v369 = vunpack.c.h.bf16 %v92
  %v370 = vunpack.c.l.bf16 %v93
  %v371 = vunpack.c.h.bf16 %v93
  %v372 = vunpack.c.l.bf16 %v94
  %v373 = vunpack.c.h.bf16 %v94
  %v374 = vunpack.c.l.bf16 %v95
  %v375 = vunpack.c.h.bf16 %v95
  %v376 = vunpack.c.l.bf16 %v96
  %v377 = vunpack.c.h.bf16 %v96
  %v378 = vunpack.c.l.bf16 %v97
  %v379 = vunpack.c.h.bf16 %v97
  %v380 = vunpack.c.l.bf16 %v98
  %v381 = vunpack.c.h.bf16 %v98
  %v382 = vunpack.c.l.bf16 %v99
  %v383 = vunpack.c.h.bf16 %v99
  %v384 = vunpack.c.l.bf16 %v100
  %v385 = vunpack.c.h.bf16 %v100
  %v386 = vunpack.c.l.bf16 %v101
  %v387 = vunpack.c.h.bf16 %v101
  %v388 = vunpack.c.l.bf16 %v102
  %v389 = vunpack.c.h.bf16 %v102
  %v390 = vunpack.c.l.bf16 %v103
  %v391 = vunpack.c.h.bf16 %v103
  %v392 = vunpack.c.l.bf16 %v104
  %v393 = vunpack.c.h.bf16 %v104
  %v394 = vunpack.c.l.bf16 %v105
  %v395 = vunpack.c.h.bf16 %v105
  %v396 = vunpack.c.l.bf16 %v106
  %v397 = vunpack.c.h.bf16 %v106
  %v398 = vunpack.c.l.bf16 %v107
  %v399 = vunpack.c.h.bf16 %v107
  %v400 = vunpack.c.l.bf16 %v108
  %v401 = vunpack.c.h.bf16 %v108
  %v402 = vunpack.c.l.bf16 %v109
  %v403 = vunpack.c.h.bf16 %v109
  %v404 = vunpack.c.l.bf16 %v110
  %v405 = vunpack.c.h.bf16 %v110
  %v406 = vunpack.c.l.bf16 %v111
  %v407 = vunpack.c.h.bf16 %v111
  %v408 = vunpack.c.l.bf16 %v112
  %v409 = vunpack.c.h.bf16 %v112
  %v410 = vunpack.c.l.bf16 %v113
  %v411 = vunpack.c.h.bf16 %v113
  %v412 = vunpack.c.l.bf16 %v114
  %v413 = vunpack.c.h.bf16 %v114
  %v414 = vunpack.c.l.bf16 %v115
  %v415 = vunpack.c.h.bf16 %v115
  %v416 = vunpack.c.l.bf16 %v116
  %v417 = vunpack.c.h.bf16 %v116
  %v418 = vunpack.c.l.bf16 %v117
  %v419 = vunpack.c.h.bf16 %v117
  %v420 = vunpack.c.l.bf16 %v118
  %v421 = vunpack.c.h.bf16 %v118
  %v422 = vunpack.c.l.bf16 %v119
  %v423 = vunpack.c.h.bf16 %v119
  %v424 = vunpack.c.l.bf16 %v120
  %v425 = vunpack.c.h.bf16 %v120
  %v426 = vunpack.c.l.bf16 %v121
  %v427 = vunpack.c.h.bf16 %v121
  %v428 = vunpack.c.l.bf16 %v122
  %v429 = vunpack.c.h.bf16 %v122
  %v430 = vunpack.c.l.bf16 %v123
  %v431 = vunpack.c.h.bf16 %v123
  %v432 = vunpack.c.l.bf16 %v124
  %v433 = vunpack.c.h.bf16 %v124
  %v434 = vunpack.c.l.bf16 %v125
  %v435 = vunpack.c.h.bf16 %v125
  %v436 = vunpack.c.l.bf16 %v126
  %v437 = vunpack.c.h.bf16 %v126
  %v438 = vunpack.c.l.bf16 %v127
  %v439 = vunpack.c.h.bf16 %v127
  %v440 = vunpack.c.l.bf16 %v128
  %v441 = vunpack.c.h.bf16 %v128
  %v442 = vunpack.c.l.bf16 %v129
  %v443 = vunpack.c.h.bf16 %v129
  %v444 = vunpack.c.l.bf16 %v130
  %v445 = vunpack.c.h.bf16 %v130
  %v446 = vunpack.c.l.bf16 %v131
  %v447 = vunpack.c.h.bf16 %v131
  %v448 = vunpack.c.l.bf16 %v132
  %v449 = vunpack.c.h.bf16 %v132
  %v450 = vunpack.c.l.bf16 %v133
  %v451 = vunpack.c.h.bf16 %v133
  %v452 = vunpack.c.l.bf16 %v134
  %v453 = vunpack.c.h.bf16 %v134
  %v454 = vunpack.c.l.bf16 %v135
  %v455 = vunpack.c.h.bf16 %v135
  %v456 = vunpack.c.l.bf16 %v136
  %v457 = vunpack.c.h.bf16 %v136
  %v458 = vunpack.c.l.bf16 %v137
  %v459 = vunpack.c.h.bf16 %v137
  %v460 = vunpack.c.l.bf16 %v138
  %v461 = vunpack.c.h.bf16 %v138
  %v462 = vunpack.c.l.bf16 %v139
  %v463 = vunpack.c.h.bf16 %v139
  %v464 = vunpack.c.l.bf16 %v140
  %v465 = vunpack.c.h.bf16 %v140
  %v466 = vunpack.c.l.bf16 %v141
  %v467 = vunpack.c.h.bf16 %v141
  %v468 = vunpack.c.l.bf16 %v142
  %v469 = vunpack.c.h.bf16 %v142
  %v470 = vunpack.c.l.bf16 %v143
  %v471 = vunpack.c.h.bf16 %v143
  %v472 = vunpack.c.l.bf16 %v144
  %v473 = vunpack.c.h.bf16 %v144
  %v474 = vunpack.c.l.bf16 %v145
  %v475 = vunpack.c.h.bf16 %v145
  %v476 = vunpack.c.l.bf16 %v146
  %v477 = vunpack.c.h.bf16 %v146
  %v478 = vunpack.c.l.bf16 %v147
  %v479 = vunpack.c.h.bf16 %v147
  %v480 = vunpack.c.l.bf16 %v148
  %v481 = vunpack.c.h.bf16 %v148
  %v482 = vunpack.c.l.bf16 %v149
  %v483 = vunpack.c.h.bf16 %v149
  %v484 = vunpack.c.l.bf16 %v150
  %v485 = vunpack.c.h.bf16 %v150
  %v486 = vunpack.c.l.bf16 %v151
  %v487 = vunpack.c.h.bf16 %v151
  %v488 = vunpack.c.l.bf16 %v152
  %v489 = vunpack.c.h.bf16 %v152
  %v490 = vunpack.c.l.bf16 %v153
  %v491 = vunpack.c.h.bf16 %v153
  %v492 = vunpack.c.l.bf16 %v154
  %v493 = vunpack.c.h.bf16 %v154
  %v494 = vunpack.c.l.bf16 %v155
  %v495 = vunpack.c.h.bf16 %v155
  %v496 = vunpack.c.l.bf16 %v156
  %v497 = vunpack.c.h.bf16 %v156
  %v498 = vunpack.c.l.bf16 %v157
  %v499 = vunpack.c.h.bf16 %v157
  %v500 = vunpack.c.l.bf16 %v158
  %v501 = vunpack.c.h.bf16 %v158
  %v502 = vunpack.c.l.bf16 %v159
  %v503 = vunpack.c.h.bf16 %v159
  %v504 = vunpack.c.l.bf16 %v160
  %v505 = vunpack.c.h.bf16 %v160
  %v506 = vunpack.c.l.bf16 %v161
  %v507 = vunpack.c.h.bf16 %v161
  %v508 = vunpack.c.l.bf16 %v162
  %v509 = vunpack.c.h.bf16 %v162
  %v510 = vunpack.c.l.bf16 %v163
  %v511 = vunpack.c.h.bf16 %v163
  %v512 = vunpack.c.l.bf16 %v164
  %v513 = vunpack.c.h.bf16 %v164
  %v514 = vunpack.c.l.bf16 %v165
  %v515 = vunpack.c.h.bf16 %v165
  %v516 = vunpack.c.l.bf16 %v166
  %v517 = vunpack.c.h.bf16 %v166
  %v518 = vunpack.c.l.bf16 %v167
  %v519 = vunpack.c.h.bf16 %v167
  %v520 = vunpack.c.l.bf16 %v168
  %v521 = vunpack.c.h.bf16 %v168
  %v522 = vunpack.c.l.bf16 %v169
  %v523 = vunpack.c.h.bf16 %v169
  %v524 = vunpack.c.l.bf16 %v170
  %v525 = vunpack.c.h.bf16 %v170
  %v526 = vunpack.c.l.bf16 %v171
  %v527 = vunpack.c.h.bf16 %v171
  %v528 = vunpack.c.l.bf16 %v172
  %v529 = vunpack.c.h.bf16 %v172
  %v530 = vunpack.c.l.bf16 %v173
  %v531 = vunpack.c.h.bf16 %v173
  %v532 = vunpack.c.l.bf16 %v174
  %v533 = vunpack.c.h.bf16 %v174
  %v534 = vunpack.c.l.bf16 %v175
  %v535 = vunpack.c.h.bf16 %v175
  %v536 = vunpack.c.l.bf16 %v176
  %v537 = vunpack.c.h.bf16 %v176
  %v538 = vunpack.c.l.bf16 %v177
  %v539 = vunpack.c.h.bf16 %v177
  %v540 = vunpack.c.l.bf16 %v178
  %v541 = vunpack.c.h.bf16 %v178
  %v542 = vunpack.c.l.bf16 %v179
  %v543 = vunpack.c.h.bf16 %v179
  %v544 = vunpack.c.l.bf16 %v180
  %v545 = vunpack.c.h.bf16 %v180
  %v546 = vunpack.c.l.bf16 %v181
  %v547 = vunpack.c.h.bf16 %v181
  %v548 = vunpack.c.l.bf16 %v182
  %v549 = vunpack.c.h.bf16 %v182
  %v550 = vunpack.c.l.bf16 %v183
  %v551 = vunpack.c.h.bf16 %v183
  %v552 = vunpack.c.l.bf16 %v184
  %v553 = vunpack.c.h.bf16 %v184
  %v554 = vunpack.c.l.bf16 %v185
  %v555 = vunpack.c.h.bf16 %v185
  %v556 = vunpack.c.l.bf16 %v186
  %v557 = vunpack.c.h.bf16 %v186
  %v558 = vunpack.c.l.bf16 %v187
  %v559 = vunpack.c.h.bf16 %v187
  %v560 = vunpack.c.l.bf16 %v188
  %v561 = vunpack.c.h.bf16 %v188
  %v562 = vunpack.c.l.bf16 %v189
  %v563 = vunpack.c.h.bf16 %v189
  %v564 = vunpack.c.l.bf16 %v190
  %v565 = vunpack.c.h.bf16 %v190
  %v566 = vunpack.c.l.bf16 %v191
  %v567 = vunpack.c.h.bf16 %v191
  %v568 = vunpack.c.l.bf16 %v192
  %v569 = vunpack.c.h.bf16 %v192
  %v570 = vunpack.c.l.bf16 %v193
  %v571 = vunpack.c.h.bf16 %v193
  %v572 = vunpack.c.l.bf16 %v194
  %v573 = vunpack.c.h.bf16 %v194
  %v574 = vunpack.c.l.bf16 %v195
  %v575 = vunpack.c.h.bf16 %v195
  %v576 = vunpack.c.l.bf16 %v196
  %v577 = vunpack.c.h.bf16 %v196
  %v578 = vunpack.c.l.bf16 %v197
  %v579 = vunpack.c.h.bf16 %v197
  %v580 = vunpack.c.l.bf16 %v198
  %v581 = vunpack.c.h.bf16 %v198
  %v582 = vunpack.c.l.bf16 %v199
  %v583 = vunpack.c.h.bf16 %v199
  %v584 = vunpack.c.l.bf16 %v200
  %v585 = vunpack.c.h.bf16 %v200
  %v586 = vunpack.c.l.bf16 %v201
  %v587 = vunpack.c.h.bf16 %v201
  %v588 = vunpack.c.l.bf16 %v202
  %v589 = vunpack.c.h.bf16 %v202
  %v590 = vunpack.c.l.bf16 %v203
  %v591 = vunpack.c.h.bf16 %v203
  %v592 = vunpack.c.l.bf16 %v204
  %v593 = vunpack.c.h.bf16 %v204
  %v594 = vunpack.c.l.bf16 %v205
  %v595 = vunpack.c.h.bf16 %v205
  %v596 = vunpack.c.l.bf16 %v206
  %v597 = vunpack.c.h.bf16 %v206
  %v598 = vunpack.c.l.bf16 %v207
  %v599 = vunpack.c.h.bf16 %v207
  %v600 = vunpack.c.l.bf16 %v208
  %v601 = vunpack.c.h.bf16 %v208
  %v602 = vunpack.c.l.bf16 %v209
  %v603 = vunpack.c.h.bf16 %v209
  %v604 = vunpack.c.l.bf16 %v210
  %v605 = vunpack.c.h.bf16 %v210
  %v606 = vunpack.c.l.bf16 %v211
  %v607 = vunpack.c.h.bf16 %v211
  %v608 = vunpack.c.l.bf16 %v212
  %v609 = vunpack.c.h.bf16 %v212
  %v610 = vunpack.c.l.bf16 %v213
  %v611 = vunpack.c.h.bf16 %v213
  %v612 = vunpack.c.l.bf16 %v214
  %v613 = vunpack.c.h.bf16 %v214
  %v614 = vunpack.c.l.bf16 %v215
  %v615 = vunpack.c.h.bf16 %v215
  %v616 = vunpack.c.l.bf16 %v216
  %v617 = vunpack.c.h.bf16 %v216
  %v618 = vunpack.c.l.bf16 %v217
  %v619 = vunpack.c.h.bf16 %v217
  %v620 = vunpack.c.l.bf16 %v218
  %v621 = vunpack.c.h.bf16 %v218
  %v622 = vunpack.c.l.bf16 %v219
  %v623 = vunpack.c.h.bf16 %v219
  %v624 = vunpack.c.l.bf16 %v220
  %v625 = vunpack.c.h.bf16 %v220
  %v626 = vunpack.c.l.bf16 %v221
  %v627 = vunpack.c.h.bf16 %v221
  %v628 = vunpack.c.l.bf16 %v222
  %v629 = vunpack.c.h.bf16 %v222
  %v630 = vunpack.c.l.bf16 %v223
  %v631 = vunpack.c.h.bf16 %v223
  %v632 = vunpack.c.l.bf16 %v224
  %v633 = vunpack.c.h.bf16 %v224
  %v634 = vunpack.c.l.bf16 %v225
  %v635 = vunpack.c.h.bf16 %v225
  %v636 = vunpack.c.l.bf16 %v226
  %v637 = vunpack.c.h.bf16 %v226
  %v638 = vunpack.c.l.bf16 %v227
  %v639 = vunpack.c.h.bf16 %v227
  %v640 = vunpack.c.l.bf16 %v228
  %v641 = vunpack.c.h.bf16 %v228
  %v642 = vunpack.c.l.bf16 %v229
  %v643 = vunpack.c.h.bf16 %v229
  %v644 = vunpack.c.l.bf16 %v230
  %v645 = vunpack.c.h.bf16 %v230
  %v646 = vunpack.c.l.bf16 %v231
  %v647 = vunpack.c.h.bf16 %v231
  %v648 = vunpack.c.l.bf16 %v232
  %v649 = vunpack.c.h.bf16 %v232
  %v650 = vunpack.c.l.bf16 %v233
  %v651 = vunpack.c.h.bf16 %v233
  %v652 = vunpack.c.l.bf16 %v234
  %v653 = vunpack.c.h.bf16 %v234
  %v654 = vunpack.c.l.bf16 %v235
  %v655 = vunpack.c.h.bf16 %v235
  %v656 = vunpack.c.l.bf16 %v236
  %v657 = vunpack.c.h.bf16 %v236
  %v658 = vunpack.c.l.bf16 %v237
  %v659 = vunpack.c.h.bf16 %v237
  %v660 = vunpack.c.l.bf16 %v238
  %v661 = vunpack.c.h.bf16 %v238
  %v662 = vunpack.c.l.bf16 %v239
  %v663 = vunpack.c.h.bf16 %v239
  %v664 = vunpack.c.l.bf16 %v240
  %v665 = vunpack.c.h.bf16 %v240
  %v666 = vunpack.c.l.bf16 %v241
  %v667 = vunpack.c.h.bf16 %v241
  %v668 = vunpack.c.l.bf16 %v242
  %v669 = vunpack.c.h.bf16 %v242
  %v670 = vunpack.c.l.bf16 %v243
  %v671 = vunpack.c.h.bf16 %v243
  %v672 = vunpack.c.l.bf16 %v244
  %v673 = vunpack.c.h.bf16 %v244
  %v674 = vunpack.c.l.bf16 %v245
  %v675 = vunpack.c.h.bf16 %v245
  %v676 = vunpack.c.l.bf16 %v246
  %v677 = vunpack.c.h.bf16 %v246
  %v678 = vunpack.c.l.bf16 %v247
  %v679 = vunpack.c.h.bf16 %v247
  %v680 = vunpack.c.l.bf16 %v248
  %v681 = vunpack.c.h.bf16 %v248
  %v682 = vunpack.c.l.bf16 %v249
  %v683 = vunpack.c.h.bf16 %v249
  %v684 = vunpack.c.l.bf16 %v250
  %v685 = vunpack.c.h.bf16 %v250
  %v686 = vunpack.c.l.bf16 %v251
  %v687 = vunpack.c.h.bf16 %v251
  %v688 = vunpack.c.l.bf16 %v252
  %v689 = vunpack.c.h.bf16 %v252
  %v690 = vunpack.c.l.bf16 %v253
  %v691 = vunpack.c.h.bf16 %v253
  %v692 = vunpack.c.l.bf16 %v254
  %v693 = vunpack.c.h.bf16 %v254
  %v694 = vunpack.c.l.bf16 %v255
  %v695 = vunpack.c.h.bf16 %v255
  %v696 = vunpack.c.l.bf16 %v256
  %v697 = vunpack.c.h.bf16 %v256
  %v698 = vunpack.c.l.bf16 %v257
  %v699 = vunpack.c.h.bf16 %v257
  %v700 = vunpack.c.l.bf16 %v258
  %v701 = vunpack.c.h.bf16 %v258
  %v702 = vunpack.c.l.bf16 %v259
  %v703 = vunpack.c.h.bf16 %v259
  %v704 = vunpack.c.l.bf16 %v260
  %v705 = vunpack.c.h.bf16 %v260
  %v706 = vunpack.c.l.bf16 %v261
  %v707 = vunpack.c.h.bf16 %v261
  %v708 = vunpack.c.l.bf16 %v262
  %v709 = vunpack.c.h.bf16 %v262
  %v710 = vunpack.c.l.bf16 %v263
  %v711 = vunpack.c.h.bf16 %v263
  %v712 = vunpack.c.l.bf16 %v264
  %v713 = vunpack.c.h.bf16 %v264
  %v714 = vunpack.c.l.bf16 %v265
  %v715 = vunpack.c.h.bf16 %v265
  %v716 = vunpack.c.l.bf16 %v266
  %v717 = vunpack.c.h.bf16 %v266
  %v718 = vunpack.c.l.bf16 %v267
  %v719 = vunpack.c.h.bf16 %v267
  %v720 = vunpack.c.l.bf16 %v268
  %v721 = vunpack.c.h.bf16 %v268
  %v722 = vunpack.c.l.bf16 %v269
  %v723 = vunpack.c.h.bf16 %v269
  %v724 = vunpack.c.l.bf16 %v270
  %v725 = vunpack.c.h.bf16 %v270
  %v726 = vunpack.c.l.bf16 %v271
  %v727 = vunpack.c.h.bf16 %v271
  %v728 = vunpack.c.l.bf16 %v272
  %v729 = vunpack.c.h.bf16 %v272
  %v730 = vunpack.c.l.bf16 %v273
  %v731 = vunpack.c.h.bf16 %v273
  %v732 = vunpack.c.l.bf16 %v274
  %v733 = vunpack.c.h.bf16 %v274
  %v734 = vunpack.c.l.bf16 %v275
  %v735 = vunpack.c.h.bf16 %v275
  %v736 = vunpack.c.l.bf16 %v276
  %v737 = vunpack.c.h.bf16 %v276
  %v738 = vunpack.c.l.bf16 %v277
  %v739 = vunpack.c.h.bf16 %v277
  %v740 = vunpack.c.l.bf16 %v311
  %v741 = vunpack.c.l.bf16 %v315
  %v742 = vunpack.c.l.bf16 %v319
  %v743 = vunpack.c.l.bf16 %v323
  %v744 = vunpack.c.l.bf16 %v327
  %v745 = vunpack.c.l.bf16 %v331
  %v746 = vunpack.c.l.bf16 %v335
  %v747 = vunpack.c.l.bf16 %v339
  %v748 = vunpack.c.l.bf16 %v343
  %v749 = vunpack.c.l.bf16 %v347
  %v750 = vunpack.c.l.bf16 %v351
  %v751 = vunpack.c.l.bf16 %v355
  %v752 = vmul.f32 %v356, %v740
  %v753 = vmul.f32 %v357, %v741
  %v754 = vmul.f32 %v358, %v742
  %v755 = vmul.f32 %v359, %v743
  %v756 = vmul.f32 %v360, %v744
  %v757 = vmul.f32 %v361, %v745
  %v758 = vmul.f32 %v362, %v746
  %v759 = vmul.f32 %v363, %v747
  %v760 = vmul.f32 %v364, %v748
  %v761 = vmul.f32 %v365, %v749
  %v762 = vmul.f32 %v366, %v750
  %v763 = vmul.f32 %v367, %v751
  %v764 = vmul.f32 %v368, %v740
  %v765 = vmul.f32 %v369, %v741
  %v766 = vmul.f32 %v370, %v742
  %v767 = vmul.f32 %v371, %v743
  %v768 = vmul.f32 %v372, %v744
  %v769 = vmul.f32 %v373, %v745
  %v770 = vmul.f32 %v374, %v746
  %v771 = vmul.f32 %v375, %v747
  %v772 = vmul.f32 %v376, %v748
  %v773 = vmul.f32 %v377, %v749
  %v774 = vmul.f32 %v378, %v750
  %v775 = vmul.f32 %v379, %v751
  %v776 = vmul.f32 %v380, %v740
  %v777 = vmul.f32 %v381, %v741
  %v778 = vmul.f32 %v382, %v742
  %v779 = vmul.f32 %v383, %v743
  %v780 = vmul.f32 %v384, %v744
  %v781 = vmul.f32 %v385, %v745
  %v782 = vmul.f32 %v386, %v746
  %v783 = vmul.f32 %v387, %v747
  %v784 = vmul.f32 %v388, %v748
  %v785 = vmul.f32 %v389, %v749
  %v786 = vmul.f32 %v390, %v750
  %v787 = vmul.f32 %v391, %v751
  %v788 = vmul.f32 %v392, %v740
  %v789 = vmul.f32 %v393, %v741
  %v790 = vmul.f32 %v394, %v742
  %v791 = vmul.f32 %v395, %v743
  %v792 = vmul.f32 %v396, %v744
  %v793 = vmul.f32 %v397, %v745
  %v794 = vmul.f32 %v398, %v746
  %v795 = vmul.f32 %v399, %v747
  %v796 = vmul.f32 %v400, %v748
  %v797 = vmul.f32 %v401, %v749
  %v798 = vmul.f32 %v402, %v750
  %v799 = vmul.f32 %v403, %v751
  %v800 = vmul.f32 %v404, %v740
  %v801 = vmul.f32 %v405, %v741
  %v802 = vmul.f32 %v406, %v742
  %v803 = vmul.f32 %v407, %v743
  %v804 = vmul.f32 %v408, %v744
  %v805 = vmul.f32 %v409, %v745
  %v806 = vmul.f32 %v410, %v746
  %v807 = vmul.f32 %v411, %v747
  %v808 = vmul.f32 %v412, %v748
  %v809 = vmul.f32 %v413, %v749
  %v810 = vmul.f32 %v414, %v750
  %v811 = vmul.f32 %v415, %v751
  %v812 = vmul.f32 %v416, %v740
  %v813 = vmul.f32 %v417, %v741
  %v814 = vmul.f32 %v418, %v742
  %v815 = vmul.f32 %v419, %v743
  %v816 = vmul.f32 %v420, %v744
  %v817 = vmul.f32 %v421, %v745
  %v818 = vmul.f32 %v422, %v746
  %v819 = vmul.f32 %v423, %v747
  %v820 = vmul.f32 %v424, %v748
  %v821 = vmul.f32 %v425, %v749
  %v822 = vmul.f32 %v426, %v750
  %v823 = vmul.f32 %v427, %v751
  %v824 = vmul.f32 %v428, %v740
  %v825 = vmul.f32 %v429, %v741
  %v826 = vmul.f32 %v430, %v742
  %v827 = vmul.f32 %v431, %v743
  %v828 = vmul.f32 %v432, %v744
  %v829 = vmul.f32 %v433, %v745
  %v830 = vmul.f32 %v434, %v746
  %v831 = vmul.f32 %v435, %v747
  %v832 = vmul.f32 %v436, %v748
  %v833 = vmul.f32 %v437, %v749
  %v834 = vmul.f32 %v438, %v750
  %v835 = vmul.f32 %v439, %v751
  %v836 = vmul.f32 %v440, %v740
  %v837 = vmul.f32 %v441, %v741
  %v838 = vmul.f32 %v442, %v742
  %v839 = vmul.f32 %v443, %v743
  %v840 = vmul.f32 %v444, %v744
  %v841 = vmul.f32 %v445, %v745
  %v842 = vmul.f32 %v446, %v746
  %v843 = vmul.f32 %v447, %v747
  %v844 = vmul.f32 %v448, %v748
  %v845 = vmul.f32 %v449, %v749
  %v846 = vmul.f32 %v450, %v750
  %v847 = vmul.f32 %v451, %v751
  %v848 = vmul.f32 %v452, %v740
  %v849 = vmul.f32 %v453, %v741
  %v850 = vmul.f32 %v454, %v742
  %v851 = vmul.f32 %v455, %v743
  %v852 = vmul.f32 %v456, %v744
  %v853 = vmul.f32 %v457, %v745
  %v854 = vmul.f32 %v458, %v746
  %v855 = vmul.f32 %v459, %v747
  %v856 = vmul.f32 %v460, %v748
  %v857 = vmul.f32 %v461, %v749
  %v858 = vmul.f32 %v462, %v750
  %v859 = vmul.f32 %v463, %v751
  %v860 = vmul.f32 %v464, %v740
  %v861 = vmul.f32 %v465, %v741
  %v862 = vmul.f32 %v466, %v742
  %v863 = vmul.f32 %v467, %v743
  %v864 = vmul.f32 %v468, %v744
  %v865 = vmul.f32 %v469, %v745
  %v866 = vmul.f32 %v470, %v746
  %v867 = vmul.f32 %v471, %v747
  %v868 = vmul.f32 %v472, %v748
  %v869 = vmul.f32 %v473, %v749
  %v870 = vmul.f32 %v474, %v750
  %v871 = vmul.f32 %v475, %v751
  %v872 = vmul.f32 %v476, %v740
  %v873 = vmul.f32 %v477, %v741
  %v874 = vmul.f32 %v478, %v742
  %v875 = vmul.f32 %v479, %v743
  %v876 = vmul.f32 %v480, %v744
  %v877 = vmul.f32 %v481, %v745
  %v878 = vmul.f32 %v482, %v746
  %v879 = vmul.f32 %v483, %v747
  %v880 = vmul.f32 %v484, %v748
  %v881 = vmul.f32 %v485, %v749
  %v882 = vmul.f32 %v486, %v750
  %v883 = vmul.f32 %v487, %v751
  %v884 = vmul.f32 %v488, %v740
  %v885 = vmul.f32 %v489, %v741
  %v886 = vmul.f32 %v490, %v742
  %v887 = vmul.f32 %v491, %v743
  %v888 = vmul.f32 %v492, %v744
  %v889 = vmul.f32 %v493, %v745
  %v890 = vmul.f32 %v494, %v746
  %v891 = vmul.f32 %v495, %v747
  %v892 = vmul.f32 %v496, %v748
  %v893 = vmul.f32 %v497, %v749
  %v894 = vmul.f32 %v498, %v750
  %v895 = vmul.f32 %v499, %v751
  %v896 = vmul.f32 %v500, %v740
  %v897 = vmul.f32 %v501, %v741
  %v898 = vmul.f32 %v502, %v742
  %v899 = vmul.f32 %v503, %v743
  %v900 = vmul.f32 %v504, %v744
  %v901 = vmul.f32 %v505, %v745
  %v902 = vmul.f32 %v506, %v746
  %v903 = vmul.f32 %v507, %v747
  %v904 = vmul.f32 %v508, %v748
  %v905 = vmul.f32 %v509, %v749
  %v906 = vmul.f32 %v510, %v750
  %v907 = vmul.f32 %v511, %v751
  %v908 = vmul.f32 %v512, %v740
  %v909 = vmul.f32 %v513, %v741
  %v910 = vmul.f32 %v514, %v742
  %v911 = vmul.f32 %v515, %v743
  %v912 = vmul.f32 %v516, %v744
  %v913 = vmul.f32 %v517, %v745
  %v914 = vmul.f32 %v518, %v746
  %v915 = vmul.f32 %v519, %v747
  %v916 = vmul.f32 %v520, %v748
  %v917 = vmul.f32 %v521, %v749
  %v918 = vmul.f32 %v522, %v750
  %v919 = vmul.f32 %v523, %v751
  %v920 = vmul.f32 %v524, %v740
  %v921 = vmul.f32 %v525, %v741
  %v922 = vmul.f32 %v526, %v742
  %v923 = vmul.f32 %v527, %v743
  %v924 = vmul.f32 %v528, %v744
  %v925 = vmul.f32 %v529, %v745
  %v926 = vmul.f32 %v530, %v746
  %v927 = vmul.f32 %v531, %v747
  %v928 = vmul.f32 %v532, %v748
  %v929 = vmul.f32 %v533, %v749
  %v930 = vmul.f32 %v534, %v750
  %v931 = vmul.f32 %v535, %v751
  %v932 = vmul.f32 %v536, %v740
  %v933 = vmul.f32 %v537, %v741
  %v934 = vmul.f32 %v538, %v742
  %v935 = vmul.f32 %v539, %v743
  %v936 = vmul.f32 %v540, %v744
  %v937 = vmul.f32 %v541, %v745
  %v938 = vmul.f32 %v542, %v746
  %v939 = vmul.f32 %v543, %v747
  %v940 = vmul.f32 %v544, %v748
  %v941 = vmul.f32 %v545, %v749
  %v942 = vmul.f32 %v546, %v750
  %v943 = vmul.f32 %v547, %v751
  %v944 = vmul.f32 %v548, %v740
  %v945 = vmul.f32 %v549, %v741
  %v946 = vmul.f32 %v550, %v742
  %v947 = vmul.f32 %v551, %v743
  %v948 = vmul.f32 %v552, %v744
  %v949 = vmul.f32 %v553, %v745
  %v950 = vmul.f32 %v554, %v746
  %v951 = vmul.f32 %v555, %v747
  %v952 = vmul.f32 %v556, %v748
  %v953 = vmul.f32 %v557, %v749
  %v954 = vmul.f32 %v558, %v750
  %v955 = vmul.f32 %v559, %v751
  %v956 = vmul.f32 %v560, %v740
  %v957 = vmul.f32 %v561, %v741
  %v958 = vmul.f32 %v562, %v742
  %v959 = vmul.f32 %v563, %v743
  %v960 = vmul.f32 %v564, %v744
  %v961 = vmul.f32 %v565, %v745
  %v962 = vmul.f32 %v566, %v746
  %v963 = vmul.f32 %v567, %v747
  %v964 = vmul.f32 %v568, %v748
  %v965 = vmul.f32 %v569, %v749
  %v966 = vmul.f32 %v570, %v750
  %v967 = vmul.f32 %v571, %v751
  %v968 = vmul.f32 %v572, %v740
  %v969 = vmul.f32 %v573, %v741
  %v970 = vmul.f32 %v574, %v742
  %v971 = vmul.f32 %v575, %v743
  %v972 = vmul.f32 %v576, %v744
  %v973 = vmul.f32 %v577, %v745
  %v974 = vmul.f32 %v578, %v746
  %v975 = vmul.f32 %v579, %v747
  %v976 = vmul.f32 %v580, %v748
  %v977 = vmul.f32 %v581, %v749
  %v978 = vmul.f32 %v582, %v750
  %v979 = vmul.f32 %v583, %v751
  %v980 = vmul.f32 %v584, %v740
  %v981 = vmul.f32 %v585, %v741
  %v982 = vmul.f32 %v586, %v742
  %v983 = vmul.f32 %v587, %v743
  %v984 = vmul.f32 %v588, %v744
  %v985 = vmul.f32 %v589, %v745
  %v986 = vmul.f32 %v590, %v746
  %v987 = vmul.f32 %v591, %v747
  %v988 = vmul.f32 %v592, %v748
  %v989 = vmul.f32 %v593, %v749
  %v990 = vmul.f32 %v594, %v750
  %v991 = vmul.f32 %v595, %v751
  %v992 = vmul.f32 %v596, %v740
  %v993 = vmul.f32 %v597, %v741
  %v994 = vmul.f32 %v598, %v742
  %v995 = vmul.f32 %v599, %v743
  %v996 = vmul.f32 %v600, %v744
  %v997 = vmul.f32 %v601, %v745
  %v998 = vmul.f32 %v602, %v746
  %v999 = vmul.f32 %v603, %v747
  %v1000 = vmul.f32 %v604, %v748
  %v1001 = vmul.f32 %v605, %v749
  %v1002 = vmul.f32 %v606, %v750
  %v1003 = vmul.f32 %v607, %v751
  %v1004 = vmul.f32 %v608, %v740
  %v1005 = vmul.f32 %v609, %v741
  %v1006 = vmul.f32 %v610, %v742
  %v1007 = vmul.f32 %v611, %v743
  %v1008 = vmul.f32 %v612, %v744
  %v1009 = vmul.f32 %v613, %v745
  %v1010 = vmul.f32 %v614, %v746
  %v1011 = vmul.f32 %v615, %v747
  %v1012 = vmul.f32 %v616, %v748
  %v1013 = vmul.f32 %v617, %v749
  %v1014 = vmul.f32 %v618, %v750
  %v1015 = vmul.f32 %v619, %v751
  %v1016 = vmul.f32 %v620, %v740
  %v1017 = vmul.f32 %v621, %v741
  %v1018 = vmul.f32 %v622, %v742
  %v1019 = vmul.f32 %v623, %v743
  %v1020 = vmul.f32 %v624, %v744
  %v1021 = vmul.f32 %v625, %v745
  %v1022 = vmul.f32 %v626, %v746
  %v1023 = vmul.f32 %v627, %v747
  %v1024 = vmul.f32 %v628, %v748
  %v1025 = vmul.f32 %v629, %v749
  %v1026 = vmul.f32 %v630, %v750
  %v1027 = vmul.f32 %v631, %v751
  %v1028 = vmul.f32 %v632, %v740
  %v1029 = vmul.f32 %v633, %v741
  %v1030 = vmul.f32 %v634, %v742
  %v1031 = vmul.f32 %v635, %v743
  %v1032 = vmul.f32 %v636, %v744
  %v1033 = vmul.f32 %v637, %v745
  %v1034 = vmul.f32 %v638, %v746
  %v1035 = vmul.f32 %v639, %v747
  %v1036 = vmul.f32 %v640, %v748
  %v1037 = vmul.f32 %v641, %v749
  %v1038 = vmul.f32 %v642, %v750
  %v1039 = vmul.f32 %v643, %v751
  %v1040 = vmul.f32 %v644, %v740
  %v1041 = vmul.f32 %v645, %v741
  %v1042 = vmul.f32 %v646, %v742
  %v1043 = vmul.f32 %v647, %v743
  %v1044 = vmul.f32 %v648, %v744
  %v1045 = vmul.f32 %v649, %v745
  %v1046 = vmul.f32 %v650, %v746
  %v1047 = vmul.f32 %v651, %v747
  %v1048 = vmul.f32 %v652, %v748
  %v1049 = vmul.f32 %v653, %v749
  %v1050 = vmul.f32 %v654, %v750
  %v1051 = vmul.f32 %v655, %v751
  %v1052 = vmul.f32 %v656, %v740
  %v1053 = vmul.f32 %v657, %v741
  %v1054 = vmul.f32 %v658, %v742
  %v1055 = vmul.f32 %v659, %v743
  %v1056 = vmul.f32 %v660, %v744
  %v1057 = vmul.f32 %v661, %v745
  %v1058 = vmul.f32 %v662, %v746
  %v1059 = vmul.f32 %v663, %v747
  %v1060 = vmul.f32 %v664, %v748
  %v1061 = vmul.f32 %v665, %v749
  %v1062 = vmul.f32 %v666, %v750
  %v1063 = vmul.f32 %v667, %v751
  %v1064 = vmul.f32 %v668, %v740
  %v1065 = vmul.f32 %v669, %v741
  %v1066 = vmul.f32 %v670, %v742
  %v1067 = vmul.f32 %v671, %v743
  %v1068 = vmul.f32 %v672, %v744
  %v1069 = vmul.f32 %v673, %v745
  %v1070 = vmul.f32 %v674, %v746
  %v1071 = vmul.f32 %v675, %v747
  %v1072 = vmul.f32 %v676, %v748
  %v1073 = vmul.f32 %v677, %v749
  %v1074 = vmul.f32 %v678, %v750
  %v1075 = vmul.f32 %v679, %v751
  %v1076 = vmul.f32 %v680, %v740
  %v1077 = vmul.f32 %v681, %v741
  %v1078 = vmul.f32 %v682, %v742
  %v1079 = vmul.f32 %v683, %v743
  %v1080 = vmul.f32 %v684, %v744
  %v1081 = vmul.f32 %v685, %v745
  %v1082 = vmul.f32 %v686, %v746
  %v1083 = vmul.f32 %v687, %v747
  %v1084 = vmul.f32 %v688, %v748
  %v1085 = vmul.f32 %v689, %v749
  %v1086 = vmul.f32 %v690, %v750
  %v1087 = vmul.f32 %v691, %v751
  %v1088 = vmul.f32 %v692, %v740
  %v1089 = vmul.f32 %v693, %v741
  %v1090 = vmul.f32 %v694, %v742
  %v1091 = vmul.f32 %v695, %v743
  %v1092 = vmul.f32 %v696, %v744
  %v1093 = vmul.f32 %v697, %v745
  %v1094 = vmul.f32 %v698, %v746
  %v1095 = vmul.f32 %v699, %v747
  %v1096 = vmul.f32 %v700, %v748
  %v1097 = vmul.f32 %v701, %v749
  %v1098 = vmul.f32 %v702, %v750
  %v1099 = vmul.f32 %v703, %v751
  %v1100 = vmul.f32 %v704, %v740
  %v1101 = vmul.f32 %v705, %v741
  %v1102 = vmul.f32 %v706, %v742
  %v1103 = vmul.f32 %v707, %v743
  %v1104 = vmul.f32 %v708, %v744
  %v1105 = vmul.f32 %v709, %v745
  %v1106 = vmul.f32 %v710, %v746
  %v1107 = vmul.f32 %v711, %v747
  %v1108 = vmul.f32 %v712, %v748
  %v1109 = vmul.f32 %v713, %v749
  %v1110 = vmul.f32 %v714, %v750
  %v1111 = vmul.f32 %v715, %v751
  %v1112 = vmul.f32 %v716, %v740
  %v1113 = vmul.f32 %v717, %v741
  %v1114 = vmul.f32 %v718, %v742
  %v1115 = vmul.f32 %v719, %v743
  %v1116 = vmul.f32 %v720, %v744
  %v1117 = vmul.f32 %v721, %v745
  %v1118 = vmul.f32 %v722, %v746
  %v1119 = vmul.f32 %v723, %v747
  %v1120 = vmul.f32 %v724, %v748
  %v1121 = vmul.f32 %v725, %v749
  %v1122 = vmul.f32 %v726, %v750
  %v1123 = vmul.f32 %v727, %v751
  %v1124 = vmul.f32 %v728, %v740
  %v1125 = vmul.f32 %v729, %v741
  %v1126 = vmul.f32 %v730, %v742
  %v1127 = vmul.f32 %v731, %v743
  %v1128 = vmul.f32 %v732, %v744
  %v1129 = vmul.f32 %v733, %v745
  %v1130 = vmul.f32 %v734, %v746
  %v1131 = vmul.f32 %v735, %v747
  %v1132 = vmul.f32 %v736, %v748
  %v1133 = vmul.f32 %v737, %v749
  %v1134 = vmul.f32 %v738, %v750
  %v1135 = vmul.f32 %v739, %v751
  %v1136 = vpack.c.bf16 %v764, %v752
  %v1137 = vpack.c.bf16 %v765, %v753
  %v1138 = vpack.c.bf16 %v766, %v754
  %v1139 = vpack.c.bf16 %v767, %v755
  %v1140 = vpack.c.bf16 %v768, %v756
  %v1141 = vpack.c.bf16 %v769, %v757
  %v1142 = vpack.c.bf16 %v770, %v758
  %v1143 = vpack.c.bf16 %v771, %v759
  %v1144 = vpack.c.bf16 %v772, %v760
  %v1145 = vpack.c.bf16 %v773, %v761
  %v1146 = vpack.c.bf16 %v774, %v762
  %v1147 = vpack.c.bf16 %v775, %v763
  %v1148 = vpack.c.bf16 %v788, %v776
  %v1149 = vpack.c.bf16 %v789, %v777
  %v1150 = vpack.c.bf16 %v790, %v778
  %v1151 = vpack.c.bf16 %v791, %v779
  %v1152 = vpack.c.bf16 %v792, %v780
  %v1153 = vpack.c.bf16 %v793, %v781
  %v1154 = vpack.c.bf16 %v794, %v782
  %v1155 = vpack.c.bf16 %v795, %v783
  %v1156 = vpack.c.bf16 %v796, %v784
  %v1157 = vpack.c.bf16 %v797, %v785
  %v1158 = vpack.c.bf16 %v798, %v786
  %v1159 = vpack.c.bf16 %v799, %v787
  %v1160 = vpack.c.bf16 %v812, %v800
  %v1161 = vpack.c.bf16 %v813, %v801
  %v1162 = vpack.c.bf16 %v814, %v802
  %v1163 = vpack.c.bf16 %v815, %v803
  %v1164 = vpack.c.bf16 %v816, %v804
  %v1165 = vpack.c.bf16 %v817, %v805
  %v1166 = vpack.c.bf16 %v818, %v806
  %v1167 = vpack.c.bf16 %v819, %v807
  %v1168 = vpack.c.bf16 %v820, %v808
  %v1169 = vpack.c.bf16 %v821, %v809
  %v1170 = vpack.c.bf16 %v822, %v810
  %v1171 = vpack.c.bf16 %v823, %v811
  %v1172 = vpack.c.bf16 %v836, %v824
  %v1173 = vpack.c.bf16 %v837, %v825
  %v1174 = vpack.c.bf16 %v838, %v826
  %v1175 = vpack.c.bf16 %v839, %v827
  %v1176 = vpack.c.bf16 %v840, %v828
  %v1177 = vpack.c.bf16 %v841, %v829
  %v1178 = vpack.c.bf16 %v842, %v830
  %v1179 = vpack.c.bf16 %v843, %v831
  %v1180 = vpack.c.bf16 %v844, %v832
  %v1181 = vpack.c.bf16 %v845, %v833
  %v1182 = vpack.c.bf16 %v846, %v834
  %v1183 = vpack.c.bf16 %v847, %v835
  %v1184 = vpack.c.bf16 %v860, %v848
  %v1185 = vpack.c.bf16 %v861, %v849
  %v1186 = vpack.c.bf16 %v862, %v850
  %v1187 = vpack.c.bf16 %v863, %v851
  %v1188 = vpack.c.bf16 %v864, %v852
  %v1189 = vpack.c.bf16 %v865, %v853
  %v1190 = vpack.c.bf16 %v866, %v854
  %v1191 = vpack.c.bf16 %v867, %v855
  %v1192 = vpack.c.bf16 %v868, %v856
  %v1193 = vpack.c.bf16 %v869, %v857
  %v1194 = vpack.c.bf16 %v870, %v858
  %v1195 = vpack.c.bf16 %v871, %v859
  %v1196 = vpack.c.bf16 %v884, %v872
  %v1197 = vpack.c.bf16 %v885, %v873
  %v1198 = vpack.c.bf16 %v886, %v874
  %v1199 = vpack.c.bf16 %v887, %v875
  %v1200 = vpack.c.bf16 %v888, %v876
  %v1201 = vpack.c.bf16 %v889, %v877
  %v1202 = vpack.c.bf16 %v890, %v878
  %v1203 = vpack.c.bf16 %v891, %v879
  %v1204 = vpack.c.bf16 %v892, %v880
  %v1205 = vpack.c.bf16 %v893, %v881
  %v1206 = vpack.c.bf16 %v894, %v882
  %v1207 = vpack.c.bf16 %v895, %v883
  %v1208 = vpack.c.bf16 %v908, %v896
  %v1209 = vpack.c.bf16 %v909, %v897
  %v1210 = vpack.c.bf16 %v910, %v898
  %v1211 = vpack.c.bf16 %v911, %v899
  %v1212 = vpack.c.bf16 %v912, %v900
  %v1213 = vpack.c.bf16 %v913, %v901
  %v1214 = vpack.c.bf16 %v914, %v902
  %v1215 = vpack.c.bf16 %v915, %v903
  %v1216 = vpack.c.bf16 %v916, %v904
  %v1217 = vpack.c.bf16 %v917, %v905
  %v1218 = vpack.c.bf16 %v918, %v906
  %v1219 = vpack.c.bf16 %v919, %v907
  %v1220 = vpack.c.bf16 %v932, %v920
  %v1221 = vpack.c.bf16 %v933, %v921
  %v1222 = vpack.c.bf16 %v934, %v922
  %v1223 = vpack.c.bf16 %v935, %v923
  %v1224 = vpack.c.bf16 %v936, %v924
  %v1225 = vpack.c.bf16 %v937, %v925
  %v1226 = vpack.c.bf16 %v938, %v926
  %v1227 = vpack.c.bf16 %v939, %v927
  %v1228 = vpack.c.bf16 %v940, %v928
  %v1229 = vpack.c.bf16 %v941, %v929
  %v1230 = vpack.c.bf16 %v942, %v930
  %v1231 = vpack.c.bf16 %v943, %v931
  %v1232 = vpack.c.bf16 %v956, %v944
  %v1233 = vpack.c.bf16 %v957, %v945
  %v1234 = vpack.c.bf16 %v958, %v946
  %v1235 = vpack.c.bf16 %v959, %v947
  %v1236 = vpack.c.bf16 %v960, %v948
  %v1237 = vpack.c.bf16 %v961, %v949
  %v1238 = vpack.c.bf16 %v962, %v950
  %v1239 = vpack.c.bf16 %v963, %v951
  %v1240 = vpack.c.bf16 %v964, %v952
  %v1241 = vpack.c.bf16 %v965, %v953
  %v1242 = vpack.c.bf16 %v966, %v954
  %v1243 = vpack.c.bf16 %v967, %v955
  %v1244 = vpack.c.bf16 %v980, %v968
  %v1245 = vpack.c.bf16 %v981, %v969
  %v1246 = vpack.c.bf16 %v982, %v970
  %v1247 = vpack.c.bf16 %v983, %v971
  %v1248 = vpack.c.bf16 %v984, %v972
  %v1249 = vpack.c.bf16 %v985, %v973
  %v1250 = vpack.c.bf16 %v986, %v974
  %v1251 = vpack.c.bf16 %v987, %v975
  %v1252 = vpack.c.bf16 %v988, %v976
  %v1253 = vpack.c.bf16 %v989, %v977
  %v1254 = vpack.c.bf16 %v990, %v978
  %v1255 = vpack.c.bf16 %v991, %v979
  %v1256 = vpack.c.bf16 %v1004, %v992
  %v1257 = vpack.c.bf16 %v1005, %v993
  %v1258 = vpack.c.bf16 %v1006, %v994
  %v1259 = vpack.c.bf16 %v1007, %v995
  %v1260 = vpack.c.bf16 %v1008, %v996
  %v1261 = vpack.c.bf16 %v1009, %v997
  %v1262 = vpack.c.bf16 %v1010, %v998
  %v1263 = vpack.c.bf16 %v1011, %v999
  %v1264 = vpack.c.bf16 %v1012, %v1000
  %v1265 = vpack.c.bf16 %v1013, %v1001
  %v1266 = vpack.c.bf16 %v1014, %v1002
  %v1267 = vpack.c.bf16 %v1015, %v1003
  %v1268 = vpack.c.bf16 %v1028, %v1016
  %v1269 = vpack.c.bf16 %v1029, %v1017
  %v1270 = vpack.c.bf16 %v1030, %v1018
  %v1271 = vpack.c.bf16 %v1031, %v1019
  %v1272 = vpack.c.bf16 %v1032, %v1020
  %v1273 = vpack.c.bf16 %v1033, %v1021
  %v1274 = vpack.c.bf16 %v1034, %v1022
  %v1275 = vpack.c.bf16 %v1035, %v1023
  %v1276 = vpack.c.bf16 %v1036, %v1024
  %v1277 = vpack.c.bf16 %v1037, %v1025
  %v1278 = vpack.c.bf16 %v1038, %v1026
  %v1279 = vpack.c.bf16 %v1039, %v1027
  %v1280 = vpack.c.bf16 %v1052, %v1040
  %v1281 = vpack.c.bf16 %v1053, %v1041
  %v1282 = vpack.c.bf16 %v1054, %v1042
  %v1283 = vpack.c.bf16 %v1055, %v1043
  %v1284 = vpack.c.bf16 %v1056, %v1044
  %v1285 = vpack.c.bf16 %v1057, %v1045
  %v1286 = vpack.c.bf16 %v1058, %v1046
  %v1287 = vpack.c.bf16 %v1059, %v1047
  %v1288 = vpack.c.bf16 %v1060, %v1048
  %v1289 = vpack.c.bf16 %v1061, %v1049
  %v1290 = vpack.c.bf16 %v1062, %v1050
  %v1291 = vpack.c.bf16 %v1063, %v1051
  %v1292 = vpack.c.bf16 %v1076, %v1064
  %v1293 = vpack.c.bf16 %v1077, %v1065
  %v1294 = vpack.c.bf16 %v1078, %v1066
  %v1295 = vpack.c.bf16 %v1079, %v1067
  %v1296 = vpack.c.bf16 %v1080, %v1068
  %v1297 = vpack.c.bf16 %v1081, %v1069
  %v1298 = vpack.c.bf16 %v1082, %v1070
  %v1299 = vpack.c.bf16 %v1083, %v1071
  %v1300 = vpack.c.bf16 %v1084, %v1072
  %v1301 = vpack.c.bf16 %v1085, %v1073
  %v1302 = vpack.c.bf16 %v1086, %v1074
  %v1303 = vpack.c.bf16 %v1087, %v1075
  %v1304 = vpack.c.bf16 %v1100, %v1088
  %v1305 = vpack.c.bf16 %v1101, %v1089
  %v1306 = vpack.c.bf16 %v1102, %v1090
  %v1307 = vpack.c.bf16 %v1103, %v1091
  %v1308 = vpack.c.bf16 %v1104, %v1092
  %v1309 = vpack.c.bf16 %v1105, %v1093
  %v1310 = vpack.c.bf16 %v1106, %v1094
  %v1311 = vpack.c.bf16 %v1107, %v1095
  %v1312 = vpack.c.bf16 %v1108, %v1096
  %v1313 = vpack.c.bf16 %v1109, %v1097
  %v1314 = vpack.c.bf16 %v1110, %v1098
  %v1315 = vpack.c.bf16 %v1111, %v1099
  %v1316 = vpack.c.bf16 %v1124, %v1112
  %v1317 = vpack.c.bf16 %v1125, %v1113
  %v1318 = vpack.c.bf16 %v1126, %v1114
  %v1319 = vpack.c.bf16 %v1127, %v1115
  %v1320 = vpack.c.bf16 %v1128, %v1116
  %v1321 = vpack.c.bf16 %v1129, %v1117
  %v1322 = vpack.c.bf16 %v1130, %v1118
  %v1323 = vpack.c.bf16 %v1131, %v1119
  %v1324 = vpack.c.bf16 %v1132, %v1120
  %v1325 = vpack.c.bf16 %v1133, %v1121
  %v1326 = vpack.c.bf16 %v1134, %v1122
  %v1327 = vpack.c.bf16 %v1135, %v1123
  %v1328 = vld [vmem:[%s0] sm:$0xff]
  %v1329 = vld [vmem:[%s0 + $0x8] sm:$0xff]
  %v1330 = vld [vmem:[%s0 + $0x10] sm:$0xff]
  %v1331 = vld [vmem:[%s0 + $0x18] sm:$0xff]
  %v1332 = vld [vmem:[%s0 + $0x20] sm:$0xff]
  %v1333 = vld [vmem:[%s0 + $0x28] sm:$0xff]
  %v1334 = vld [vmem:[%s0 + $0x30] sm:$0xff]
  %v1335 = vld [vmem:[%s0 + $0x38] sm:$0xff]
  %v1336 = vld [vmem:[%s0 + $0x40] sm:$0xff]
  %v1337 = vld [vmem:[%s0 + $0x48] sm:$0xff]
  %v1338 = vld [vmem:[%s0 + $0x50] sm:$0xff]
  %v1339 = vld [vmem:[%s0 + $0x58] sm:$0xff]
  %v1340 = vld [vmem:[%s0 + $0x60] sm:$0xff]
  %v1341 = vld [vmem:[%s0 + $0x68] sm:$0xff]
  %v1342 = vld [vmem:[%s0 + $0x70] sm:$0xff]
  %v1343 = vld [vmem:[%s0 + $0x78] sm:$0xff]
  %v1344 = vld [vmem:[%s0 + $0x80] sm:$0xff]
  %v1345 = vld [vmem:[%s0 + $0x88] sm:$0xff]
  %v1346 = vld [vmem:[%s0 + $0x90] sm:$0xff]
  %v1347 = vld [vmem:[%s0 + $0x98] sm:$0xff]
  %v1348 = vld [vmem:[%s0 + $0xa0] sm:$0xff]
  %v1349 = vld [vmem:[%s0 + $0xa8] sm:$0xff]
  %v1350 = vld [vmem:[%s0 + $0xb0] sm:$0xff]
  %v1351 = vld [vmem:[%s0 + $0xb8] sm:$0xff]
  %v1352 = vld [vmem:[%s0 + $0xc0] sm:$0xff]
  %v1353 = vld [vmem:[%s0 + $0xc8] sm:$0xff]
  %v1354 = vld [vmem:[%s0 + $0xd0] sm:$0xff]
  %v1355 = vld [vmem:[%s0 + $0xd8] sm:$0xff]
  %v1356 = vld [vmem:[%s0 + $0xe0] sm:$0xff]
  %v1357 = vld [vmem:[%s0 + $0xe8] sm:$0xff]
  %v1358 = vld [vmem:[%s0 + $0xf0] sm:$0xff]
  %v1359 = vld [vmem:[%s0 + $0xf8] sm:$0xff]
  %v1360 = vld [vmem:[%s0 + $0x100] sm:$0xff]
  %v1361 = vld [vmem:[%s0 + $0x108] sm:$0xff]
  %v1362 = vld [vmem:[%s0 + $0x110] sm:$0xff]
  %v1363 = vld [vmem:[%s0 + $0x118] sm:$0xff]
  %v1364 = vld [vmem:[%s0 + $0x120] sm:$0xff]
  %v1365 = vld [vmem:[%s0 + $0x128] sm:$0xff]
  %v1366 = vld [vmem:[%s0 + $0x130] sm:$0xff]
  %v1367 = vld [vmem:[%s0 + $0x138] sm:$0xff]
  %v1368 = vld [vmem:[%s0 + $0x140] sm:$0xff]
  %v1369 = vld [vmem:[%s0 + $0x148] sm:$0xff]
  %v1370 = vld [vmem:[%s0 + $0x150] sm:$0xff]
  %v1371 = vld [vmem:[%s0 + $0x158] sm:$0xff]
  %v1372 = vld [vmem:[%s0 + $0x160] sm:$0xff]
  %v1373 = vld [vmem:[%s0 + $0x168] sm:$0xff]
  %v1374 = vld [vmem:[%s0 + $0x170] sm:$0xff]
  %v1375 = vld [vmem:[%s0 + $0x178] sm:$0xff]
  %v1376 = vld [vmem:[%s0 + $0x180] sm:$0xff]
  %v1377 = vld [vmem:[%s0 + $0x188] sm:$0xff]
  %v1378 = vld [vmem:[%s0 + $0x190] sm:$0xff]
  %v1379 = vld [vmem:[%s0 + $0x198] sm:$0xff]
  %v1380 = vld [vmem:[%s0 + $0x1a0] sm:$0xff]
  %v1381 = vld [vmem:[%s0 + $0x1a8] sm:$0xff]
  %v1382 = vld [vmem:[%s0 + $0x1b0] sm:$0xff]
  %v1383 = vld [vmem:[%s0 + $0x1b8] sm:$0xff]
  %v1384 = vld [vmem:[%s0 + $0x1c0] sm:$0xff]
  %v1385 = vld [vmem:[%s0 + $0x1c8] sm:$0xff]
  %v1386 = vld [vmem:[%s0 + $0x1d0] sm:$0xff]
  %v1387 = vld [vmem:[%s0 + $0x1d8] sm:$0xff]
  %v1388 = vld [vmem:[%s0 + $0x1e0] sm:$0xff]
  %v1389 = vld [vmem:[%s0 + $0x1e8] sm:$0xff]
  %v1390 = vld [vmem:[%s0 + $0x1f0] sm:$0xff]
  %v1391 = vld [vmem:[%s0 + $0x1f8] sm:$0xff]
  %v1392 = vld [vmem:[%s0 + $0x200] sm:$0xff]
  %v1393 = vld [vmem:[%s0 + $0x208] sm:$0xff]
  %v1394 = vld [vmem:[%s0 + $0x210] sm:$0xff]
  %v1395 = vld [vmem:[%s0 + $0x218] sm:$0xff]
  %v1396 = vld [vmem:[%s0 + $0x220] sm:$0xff]
  %v1397 = vld [vmem:[%s0 + $0x228] sm:$0xff]
  %v1398 = vld [vmem:[%s0 + $0x230] sm:$0xff]
  %v1399 = vld [vmem:[%s0 + $0x238] sm:$0xff]
  %v1400 = vld [vmem:[%s0 + $0x240] sm:$0xff]
  %v1401 = vld [vmem:[%s0 + $0x248] sm:$0xff]
  %v1402 = vld [vmem:[%s0 + $0x250] sm:$0xff]
  %v1403 = vld [vmem:[%s0 + $0x258] sm:$0xff]
  %v1404 = vld [vmem:[%s0 + $0x260] sm:$0xff]
  %v1405 = vld [vmem:[%s0 + $0x268] sm:$0xff]
  %v1406 = vld [vmem:[%s0 + $0x270] sm:$0xff]
  %v1407 = vld [vmem:[%s0 + $0x278] sm:$0xff]
  %v1408 = vld [vmem:[%s0 + $0x280] sm:$0xff]
  %v1409 = vld [vmem:[%s0 + $0x288] sm:$0xff]
  %v1410 = vld [vmem:[%s0 + $0x290] sm:$0xff]
  %v1411 = vld [vmem:[%s0 + $0x298] sm:$0xff]
  %v1412 = vld [vmem:[%s0 + $0x2a0] sm:$0xff]
  %v1413 = vld [vmem:[%s0 + $0x2a8] sm:$0xff]
  %v1414 = vld [vmem:[%s0 + $0x2b0] sm:$0xff]
  %v1415 = vld [vmem:[%s0 + $0x2b8] sm:$0xff]
  %v1416 = vld [vmem:[%s0 + $0x2c0] sm:$0xff]
  %v1417 = vld [vmem:[%s0 + $0x2c8] sm:$0xff]
  %v1418 = vld [vmem:[%s0 + $0x2d0] sm:$0xff]
  %v1419 = vld [vmem:[%s0 + $0x2d8] sm:$0xff]
  %v1420 = vld [vmem:[%s0 + $0x2e0] sm:$0xff]
  %v1421 = vld [vmem:[%s0 + $0x2e8] sm:$0xff]
  %v1422 = vld [vmem:[%s0 + $0x2f0] sm:$0xff]
  %v1423 = vld [vmem:[%s0 + $0x2f8] sm:$0xff]
  %v1424 = vld [vmem:[%s0 + $0x300] sm:$0xff]
  %v1425 = vld [vmem:[%s0 + $0x308] sm:$0xff]
  %v1426 = vld [vmem:[%s0 + $0x310] sm:$0xff]
  %v1427 = vld [vmem:[%s0 + $0x318] sm:$0xff]
  %v1428 = vld [vmem:[%s0 + $0x320] sm:$0xff]
  %v1429 = vld [vmem:[%s0 + $0x328] sm:$0xff]
  %v1430 = vld [vmem:[%s0 + $0x330] sm:$0xff]
  %v1431 = vld [vmem:[%s0 + $0x338] sm:$0xff]
  %v1432 = vld [vmem:[%s0 + $0x340] sm:$0xff]
  %v1433 = vld [vmem:[%s0 + $0x348] sm:$0xff]
  %v1434 = vld [vmem:[%s0 + $0x350] sm:$0xff]
  %v1435 = vld [vmem:[%s0 + $0x358] sm:$0xff]
  %v1436 = vld [vmem:[%s0 + $0x360] sm:$0xff]
  %v1437 = vld [vmem:[%s0 + $0x368] sm:$0xff]
  %v1438 = vld [vmem:[%s0 + $0x370] sm:$0xff]
  %v1439 = vld [vmem:[%s0 + $0x378] sm:$0xff]
  %v1440 = vld [vmem:[%s0 + $0x380] sm:$0xff]
  %v1441 = vld [vmem:[%s0 + $0x388] sm:$0xff]
  %v1442 = vld [vmem:[%s0 + $0x390] sm:$0xff]
  %v1443 = vld [vmem:[%s0 + $0x398] sm:$0xff]
  %v1444 = vld [vmem:[%s0 + $0x3a0] sm:$0xff]
  %v1445 = vld [vmem:[%s0 + $0x3a8] sm:$0xff]
  %v1446 = vld [vmem:[%s0 + $0x3b0] sm:$0xff]
  %v1447 = vld [vmem:[%s0 + $0x3b8] sm:$0xff]
  %v1448 = vld [vmem:[%s0 + $0x3c0] sm:$0xff]
  %v1449 = vld [vmem:[%s0 + $0x3c8] sm:$0xff]
  %v1450 = vld [vmem:[%s0 + $0x3d0] sm:$0xff]
  %v1451 = vld [vmem:[%s0 + $0x3d8] sm:$0xff]
  %v1452 = vld [vmem:[%s0 + $0x3e0] sm:$0xff]
  %v1453 = vld [vmem:[%s0 + $0x3e8] sm:$0xff]
  %v1454 = vld [vmem:[%s0 + $0x3f0] sm:$0xff]
  %v1455 = vld [vmem:[%s0 + $0x3f8] sm:$0xff]
  %v1456 = vld [vmem:[%s0 + $0x400] sm:$0xff]
  %v1457 = vld [vmem:[%s0 + $0x408] sm:$0xff]
  %v1458 = vld [vmem:[%s0 + $0x410] sm:$0xff]
  %v1459 = vld [vmem:[%s0 + $0x418] sm:$0xff]
  %v1460 = vld [vmem:[%s0 + $0x420] sm:$0xff]
  %v1461 = vld [vmem:[%s0 + $0x428] sm:$0xff]
  %v1462 = vld [vmem:[%s0 + $0x430] sm:$0xff]
  %v1463 = vld [vmem:[%s0 + $0x438] sm:$0xff]
  %v1464 = vld [vmem:[%s0 + $0x440] sm:$0xff]
  %v1465 = vld [vmem:[%s0 + $0x448] sm:$0xff]
  %v1466 = vld [vmem:[%s0 + $0x450] sm:$0xff]
  %v1467 = vld [vmem:[%s0 + $0x458] sm:$0xff]
  %v1468 = vld [vmem:[%s0 + $0x460] sm:$0xff]
  %v1469 = vld [vmem:[%s0 + $0x468] sm:$0xff]
  %v1470 = vld [vmem:[%s0 + $0x470] sm:$0xff]
  %v1471 = vld [vmem:[%s0 + $0x478] sm:$0xff]
  %v1472 = vld [vmem:[%s0 + $0x480] sm:$0xff]
  %v1473 = vld [vmem:[%s0 + $0x488] sm:$0xff]
  %v1474 = vld [vmem:[%s0 + $0x490] sm:$0xff]
  %v1475 = vld [vmem:[%s0 + $0x498] sm:$0xff]
  %v1476 = vld [vmem:[%s0 + $0x4a0] sm:$0xff]
  %v1477 = vld [vmem:[%s0 + $0x4a8] sm:$0xff]
  %v1478 = vld [vmem:[%s0 + $0x4b0] sm:$0xff]
  %v1479 = vld [vmem:[%s0 + $0x4b8] sm:$0xff]
  %v1480 = vld [vmem:[%s0 + $0x4c0] sm:$0xff]
  %v1481 = vld [vmem:[%s0 + $0x4c8] sm:$0xff]
  %v1482 = vld [vmem:[%s0 + $0x4d0] sm:$0xff]
  %v1483 = vld [vmem:[%s0 + $0x4d8] sm:$0xff]
  %v1484 = vld [vmem:[%s0 + $0x4e0] sm:$0xff]
  %v1485 = vld [vmem:[%s0 + $0x4e8] sm:$0xff]
  %v1486 = vld [vmem:[%s0 + $0x4f0] sm:$0xff]
  %v1487 = vld [vmem:[%s0 + $0x4f8] sm:$0xff]
  %v1488 = vld [vmem:[%s0 + $0x500] sm:$0xff]
  %v1489 = vld [vmem:[%s0 + $0x508] sm:$0xff]
  %v1490 = vld [vmem:[%s0 + $0x510] sm:$0xff]
  %v1491 = vld [vmem:[%s0 + $0x518] sm:$0xff]
  %v1492 = vld [vmem:[%s0 + $0x520] sm:$0xff]
  %v1493 = vld [vmem:[%s0 + $0x528] sm:$0xff]
  %v1494 = vld [vmem:[%s0 + $0x530] sm:$0xff]
  %v1495 = vld [vmem:[%s0 + $0x538] sm:$0xff]
  %v1496 = vld [vmem:[%s0 + $0x540] sm:$0xff]
  %v1497 = vld [vmem:[%s0 + $0x548] sm:$0xff]
  %v1498 = vld [vmem:[%s0 + $0x550] sm:$0xff]
  %v1499 = vld [vmem:[%s0 + $0x558] sm:$0xff]
  %v1500 = vld [vmem:[%s0 + $0x560] sm:$0xff]
  %v1501 = vld [vmem:[%s0 + $0x568] sm:$0xff]
  %v1502 = vld [vmem:[%s0 + $0x570] sm:$0xff]
  %v1503 = vld [vmem:[%s0 + $0x578] sm:$0xff]
  %v1504 = vld [vmem:[%s0 + $0x580] sm:$0xff]
  %v1505 = vld [vmem:[%s0 + $0x588] sm:$0xff]
  %v1506 = vld [vmem:[%s0 + $0x590] sm:$0xff]
  %v1507 = vld [vmem:[%s0 + $0x598] sm:$0xff]
  %v1508 = vld [vmem:[%s0 + $0x5a0] sm:$0xff]
  %v1509 = vld [vmem:[%s0 + $0x5a8] sm:$0xff]
  %v1510 = vld [vmem:[%s0 + $0x5b0] sm:$0xff]
  %v1511 = vld [vmem:[%s0 + $0x5b8] sm:$0xff]
  %v1512 = vld [vmem:[%s0 + $0x5c0] sm:$0xff]
  %v1513 = vld [vmem:[%s0 + $0x5c8] sm:$0xff]
  %v1514 = vld [vmem:[%s0 + $0x5d0] sm:$0xff]
  %v1515 = vld [vmem:[%s0 + $0x5d8] sm:$0xff]
  %v1516 = vld [vmem:[%s0 + $0x5e0] sm:$0xff]
  %v1517 = vld [vmem:[%s0 + $0x5e8] sm:$0xff]
  %v1518 = vld [vmem:[%s0 + $0x5f0] sm:$0xff]
  %v1519 = vld [vmem:[%s0 + $0x5f8] sm:$0xff]
  %v1520 = vpack.c.bf16 %v1329, %v1328
  %v1521 = vpack.c.bf16 %v1331, %v1330
  %v1522 = vpack.c.bf16 %v1333, %v1332
  %v1523 = vpack.c.bf16 %v1335, %v1334
  %v1524 = vpack.c.bf16 %v1337, %v1336
  %v1525 = vpack.c.bf16 %v1339, %v1338
  %v1526 = vpack.c.bf16 %v1341, %v1340
  %v1527 = vpack.c.bf16 %v1343, %v1342
  %v1528 = vpack.c.bf16 %v1345, %v1344
  %v1529 = vpack.c.bf16 %v1347, %v1346
  %v1530 = vpack.c.bf16 %v1349, %v1348
  %v1531 = vpack.c.bf16 %v1351, %v1350
  %v1532 = vpack.c.bf16 %v1353, %v1352
  %v1533 = vpack.c.bf16 %v1355, %v1354
  %v1534 = vpack.c.bf16 %v1357, %v1356
  %v1535 = vpack.c.bf16 %v1359, %v1358
  %v1536 = vpack.c.bf16 %v1361, %v1360
  %v1537 = vpack.c.bf16 %v1363, %v1362
  %v1538 = vpack.c.bf16 %v1365, %v1364
  %v1539 = vpack.c.bf16 %v1367, %v1366
  %v1540 = vpack.c.bf16 %v1369, %v1368
  %v1541 = vpack.c.bf16 %v1371, %v1370
  %v1542 = vpack.c.bf16 %v1373, %v1372
  %v1543 = vpack.c.bf16 %v1375, %v1374
  %v1544 = vpack.c.bf16 %v1377, %v1376
  %v1545 = vpack.c.bf16 %v1379, %v1378
  %v1546 = vpack.c.bf16 %v1381, %v1380
  %v1547 = vpack.c.bf16 %v1383, %v1382
  %v1548 = vpack.c.bf16 %v1385, %v1384
  %v1549 = vpack.c.bf16 %v1387, %v1386
  %v1550 = vpack.c.bf16 %v1389, %v1388
  %v1551 = vpack.c.bf16 %v1391, %v1390
  %v1552 = vpack.c.bf16 %v1393, %v1392
  %v1553 = vpack.c.bf16 %v1395, %v1394
  %v1554 = vpack.c.bf16 %v1397, %v1396
  %v1555 = vpack.c.bf16 %v1399, %v1398
  %v1556 = vpack.c.bf16 %v1401, %v1400
  %v1557 = vpack.c.bf16 %v1403, %v1402
  %v1558 = vpack.c.bf16 %v1405, %v1404
  %v1559 = vpack.c.bf16 %v1407, %v1406
  %v1560 = vpack.c.bf16 %v1409, %v1408
  %v1561 = vpack.c.bf16 %v1411, %v1410
  %v1562 = vpack.c.bf16 %v1413, %v1412
  %v1563 = vpack.c.bf16 %v1415, %v1414
  %v1564 = vpack.c.bf16 %v1417, %v1416
  %v1565 = vpack.c.bf16 %v1419, %v1418
  %v1566 = vpack.c.bf16 %v1421, %v1420
  %v1567 = vpack.c.bf16 %v1423, %v1422
  %v1568 = vpack.c.bf16 %v1425, %v1424
  %v1569 = vpack.c.bf16 %v1427, %v1426
  %v1570 = vpack.c.bf16 %v1429, %v1428
  %v1571 = vpack.c.bf16 %v1431, %v1430
  %v1572 = vpack.c.bf16 %v1433, %v1432
  %v1573 = vpack.c.bf16 %v1435, %v1434
  %v1574 = vpack.c.bf16 %v1437, %v1436
  %v1575 = vpack.c.bf16 %v1439, %v1438
  %v1576 = vpack.c.bf16 %v1441, %v1440
  %v1577 = vpack.c.bf16 %v1443, %v1442
  %v1578 = vpack.c.bf16 %v1445, %v1444
  %v1579 = vpack.c.bf16 %v1447, %v1446
  %v1580 = vpack.c.bf16 %v1449, %v1448
  %v1581 = vpack.c.bf16 %v1451, %v1450
  %v1582 = vpack.c.bf16 %v1453, %v1452
  %v1583 = vpack.c.bf16 %v1455, %v1454
  %v1584 = vpack.c.bf16 %v1457, %v1456
  %v1585 = vpack.c.bf16 %v1459, %v1458
  %v1586 = vpack.c.bf16 %v1461, %v1460
  %v1587 = vpack.c.bf16 %v1463, %v1462
  %v1588 = vpack.c.bf16 %v1465, %v1464
  %v1589 = vpack.c.bf16 %v1467, %v1466
  %v1590 = vpack.c.bf16 %v1469, %v1468
  %v1591 = vpack.c.bf16 %v1471, %v1470
  %v1592 = vpack.c.bf16 %v1473, %v1472
  %v1593 = vpack.c.bf16 %v1475, %v1474
  %v1594 = vpack.c.bf16 %v1477, %v1476
  %v1595 = vpack.c.bf16 %v1479, %v1478
  %v1596 = vpack.c.bf16 %v1481, %v1480
  %v1597 = vpack.c.bf16 %v1483, %v1482
  %v1598 = vpack.c.bf16 %v1485, %v1484
  %v1599 = vpack.c.bf16 %v1487, %v1486
  %v1600 = vpack.c.bf16 %v1489, %v1488
  %v1601 = vpack.c.bf16 %v1491, %v1490
  %v1602 = vpack.c.bf16 %v1493, %v1492
  %v1603 = vpack.c.bf16 %v1495, %v1494
  %v1604 = vpack.c.bf16 %v1497, %v1496
  %v1605 = vpack.c.bf16 %v1499, %v1498
  %v1606 = vpack.c.bf16 %v1501, %v1500
  %v1607 = vpack.c.bf16 %v1503, %v1502
  %v1608 = vpack.c.bf16 %v1505, %v1504
  %v1609 = vpack.c.bf16 %v1507, %v1506
  %v1610 = vpack.c.bf16 %v1509, %v1508
  %v1611 = vpack.c.bf16 %v1511, %v1510
  %v1612 = vpack.c.bf16 %v1513, %v1512
  %v1613 = vpack.c.bf16 %v1515, %v1514
  %v1614 = vpack.c.bf16 %v1517, %v1516
  %v1615 = vpack.c.bf16 %v1519, %v1518
  %1616 = vmatpush.bf16.msra.mxu0 %v1527
  %1617 = vmatpush.bf16.msra.mxu0 %v1526
  %1618 = vmatpush.bf16.msra.mxu0 %v1525
  %1619 = vmatpush.bf16.msra.mxu0 %v1524
  %1620 = vmatpush.bf16.msra.mxu0 %v1523
  %1621 = vmatpush.bf16.msra.mxu0 %v1522
  %1622 = vmatpush.bf16.msra.mxu0 %v1521
  %1623 = vmatpush.bf16.msra.mxu0 %v1520
  %1624 = vmatmul.bf16.gmra.mxu0 %v1136
  %v1625 = vpop.f32.mrf.mxu0
  %v1626 = vadd.f32 0.0, %v1625
  %v1627 = vpop.f32.mrf.mxu0
  %v1628 = vadd.f32 0.0, %v1627
  %1629 = vmatmul.bf16.gmra.mxu0 %v1148
  %v1630 = vpop.f32.mrf.mxu0
  %v1631 = vadd.f32 0.0, %v1630
  %v1632 = vpop.f32.mrf.mxu0
  %v1633 = vadd.f32 0.0, %v1632
  %1634 = vmatmul.bf16.gmra.mxu0 %v1160
  %v1635 = vpop.f32.mrf.mxu0
  %v1636 = vadd.f32 0.0, %v1635
  %v1637 = vpop.f32.mrf.mxu0
  %v1638 = vadd.f32 0.0, %v1637
  %1639 = vmatmul.bf16.gmra.mxu0 %v1172
  %v1640 = vpop.f32.mrf.mxu0
  %v1641 = vadd.f32 0.0, %v1640
  %v1642 = vpop.f32.mrf.mxu0
  %v1643 = vadd.f32 0.0, %v1642
  %1644 = vmatmul.bf16.gmra.mxu0 %v1184
  %v1645 = vpop.f32.mrf.mxu0
  %v1646 = vadd.f32 0.0, %v1645
  %v1647 = vpop.f32.mrf.mxu0
  %v1648 = vadd.f32 0.0, %v1647
  %1649 = vmatmul.bf16.gmra.mxu0 %v1196
  %v1650 = vpop.f32.mrf.mxu0
  %v1651 = vadd.f32 0.0, %v1650
  %v1652 = vpop.f32.mrf.mxu0
  %v1653 = vadd.f32 0.0, %v1652
  %1654 = vmatmul.bf16.gmra.mxu0 %v1208
  %v1655 = vpop.f32.mrf.mxu0
  %v1656 = vadd.f32 0.0, %v1655
  %v1657 = vpop.f32.mrf.mxu0
  %v1658 = vadd.f32 0.0, %v1657
  %1659 = vmatmul.bf16.gmra.mxu0 %v1220
  %v1660 = vpop.f32.mrf.mxu0
  %v1661 = vadd.f32 0.0, %v1660
  %v1662 = vpop.f32.mrf.mxu0
  %v1663 = vadd.f32 0.0, %v1662
  %1664 = vmatmul.bf16.gmra.mxu0 %v1232
  %v1665 = vpop.f32.mrf.mxu0
  %v1666 = vadd.f32 0.0, %v1665
  %v1667 = vpop.f32.mrf.mxu0
  %v1668 = vadd.f32 0.0, %v1667
  %1669 = vmatmul.bf16.gmra.mxu0 %v1244
  %v1670 = vpop.f32.mrf.mxu0
  %v1671 = vadd.f32 0.0, %v1670
  %v1672 = vpop.f32.mrf.mxu0
  %v1673 = vadd.f32 0.0, %v1672
  %1674 = vmatmul.bf16.gmra.mxu0 %v1256
  %v1675 = vpop.f32.mrf.mxu0
  %v1676 = vadd.f32 0.0, %v1675
  %v1677 = vpop.f32.mrf.mxu0
  %v1678 = vadd.f32 0.0, %v1677
  %1679 = vmatmul.bf16.gmra.mxu0 %v1268
  %v1680 = vpop.f32.mrf.mxu0
  %v1681 = vadd.f32 0.0, %v1680
  %v1682 = vpop.f32.mrf.mxu0
  %v1683 = vadd.f32 0.0, %v1682
  %1684 = vmatmul.bf16.gmra.mxu0 %v1280
  %v1685 = vpop.f32.mrf.mxu0
  %v1686 = vadd.f32 0.0, %v1685
  %v1687 = vpop.f32.mrf.mxu0
  %v1688 = vadd.f32 0.0, %v1687
  %1689 = vmatmul.bf16.gmra.mxu0 %v1292
  %v1690 = vpop.f32.mrf.mxu0
  %v1691 = vadd.f32 0.0, %v1690
  %v1692 = vpop.f32.mrf.mxu0
  %v1693 = vadd.f32 0.0, %v1692
  %1694 = vmatmul.bf16.gmra.mxu0 %v1304
  %v1695 = vpop.f32.mrf.mxu0
  %v1696 = vadd.f32 0.0, %v1695
  %v1697 = vpop.f32.mrf.mxu0
  %v1698 = vadd.f32 0.0, %v1697
  %1699 = vmatmul.bf16.gmra.mxu0 %v1316
  %v1700 = vpop.f32.mrf.mxu0
  %v1701 = vadd.f32 0.0, %v1700
  %v1702 = vpop.f32.mrf.mxu0
  %v1703 = vadd.f32 0.0, %v1702
  %1704 = vdwg.mxu0
  %1705 = vmatpush.bf16.msra.mxu0 %v1535
  %1706 = vmatpush.bf16.msra.mxu0 %v1534
  %1707 = vmatpush.bf16.msra.mxu0 %v1533
  %1708 = vmatpush.bf16.msra.mxu0 %v1532
  %1709 = vmatpush.bf16.msra.mxu0 %v1531
  %1710 = vmatpush.bf16.msra.mxu0 %v1530
  %1711 = vmatpush.bf16.msra.mxu0 %v1529
  %1712 = vmatpush.bf16.msra.mxu0 %v1528
  %1713 = vmatmul.bf16.gmra.mxu0 %v1137
  %v1714 = vpop.f32.mrf.mxu0
  %v1715 = vadd.f32 %v1626, %v1714
  %v1716 = vpop.f32.mrf.mxu0
  %v1717 = vadd.f32 %v1628, %v1716
  %1718 = vmatmul.bf16.gmra.mxu0 %v1149
  %v1719 = vpop.f32.mrf.mxu0
  %v1720 = vadd.f32 %v1631, %v1719
  %v1721 = vpop.f32.mrf.mxu0
  %v1722 = vadd.f32 %v1633, %v1721
  %1723 = vmatmul.bf16.gmra.mxu0 %v1161
  %v1724 = vpop.f32.mrf.mxu0
  %v1725 = vadd.f32 %v1636, %v1724
  %v1726 = vpop.f32.mrf.mxu0
  %v1727 = vadd.f32 %v1638, %v1726
  %1728 = vmatmul.bf16.gmra.mxu0 %v1173
  %v1729 = vpop.f32.mrf.mxu0
  %v1730 = vadd.f32 %v1641, %v1729
  %v1731 = vpop.f32.mrf.mxu0
  %v1732 = vadd.f32 %v1643, %v1731
  %1733 = vmatmul.bf16.gmra.mxu0 %v1185
  %v1734 = vpop.f32.mrf.mxu0
  %v1735 = vadd.f32 %v1646, %v1734
  %v1736 = vpop.f32.mrf.mxu0
  %v1737 = vadd.f32 %v1648, %v1736
  %1738 = vmatmul.bf16.gmra.mxu0 %v1197
  %v1739 = vpop.f32.mrf.mxu0
  %v1740 = vadd.f32 %v1651, %v1739
  %v1741 = vpop.f32.mrf.mxu0
  %v1742 = vadd.f32 %v1653, %v1741
  %1743 = vmatmul.bf16.gmra.mxu0 %v1209
  %v1744 = vpop.f32.mrf.mxu0
  %v1745 = vadd.f32 %v1656, %v1744
  %v1746 = vpop.f32.mrf.mxu0
  %v1747 = vadd.f32 %v1658, %v1746
  %1748 = vmatmul.bf16.gmra.mxu0 %v1221
  %v1749 = vpop.f32.mrf.mxu0
  %v1750 = vadd.f32 %v1661, %v1749
  %v1751 = vpop.f32.mrf.mxu0
  %v1752 = vadd.f32 %v1663, %v1751
  %1753 = vmatmul.bf16.gmra.mxu0 %v1233
  %v1754 = vpop.f32.mrf.mxu0
  %v1755 = vadd.f32 %v1666, %v1754
  %v1756 = vpop.f32.mrf.mxu0
  %v1757 = vadd.f32 %v1668, %v1756
  %1758 = vmatmul.bf16.gmra.mxu0 %v1245
  %v1759 = vpop.f32.mrf.mxu0
  %v1760 = vadd.f32 %v1671, %v1759
  %v1761 = vpop.f32.mrf.mxu0
  %v1762 = vadd.f32 %v1673, %v1761
  %1763 = vmatmul.bf16.gmra.mxu0 %v1257
  %v1764 = vpop.f32.mrf.mxu0
  %v1765 = vadd.f32 %v1676, %v1764
  %v1766 = vpop.f32.mrf.mxu0
  %v1767 = vadd.f32 %v1678, %v1766
  %1768 = vmatmul.bf16.gmra.mxu0 %v1269
  %v1769 = vpop.f32.mrf.mxu0
  %v1770 = vadd.f32 %v1681, %v1769
  %v1771 = vpop.f32.mrf.mxu0
  %v1772 = vadd.f32 %v1683, %v1771
  %1773 = vmatmul.bf16.gmra.mxu0 %v1281
  %v1774 = vpop.f32.mrf.mxu0
  %v1775 = vadd.f32 %v1686, %v1774
  %v1776 = vpop.f32.mrf.mxu0
  %v1777 = vadd.f32 %v1688, %v1776
  %1778 = vmatmul.bf16.gmra.mxu0 %v1293
  %v1779 = vpop.f32.mrf.mxu0
  %v1780 = vadd.f32 %v1691, %v1779
  %v1781 = vpop.f32.mrf.mxu0
  %v1782 = vadd.f32 %v1693, %v1781
  %1783 = vmatmul.bf16.gmra.mxu0 %v1305
  %v1784 = vpop.f32.mrf.mxu0
  %v1785 = vadd.f32 %v1696, %v1784
  %v1786 = vpop.f32.mrf.mxu0
  %v1787 = vadd.f32 %v1698, %v1786
  %1788 = vmatmul.bf16.gmra.mxu0 %v1317
  %v1789 = vpop.f32.mrf.mxu0
  %v1790 = vadd.f32 %v1701, %v1789
  %v1791 = vpop.f32.mrf.mxu0
  %v1792 = vadd.f32 %v1703, %v1791
  %1793 = vdwg.mxu0
  %1794 = vmatpush.bf16.msra.mxu0 %v1543
  %1795 = vmatpush.bf16.msra.mxu0 %v1542
  %1796 = vmatpush.bf16.msra.mxu0 %v1541
  %1797 = vmatpush.bf16.msra.mxu0 %v1540
  %1798 = vmatpush.bf16.msra.mxu0 %v1539
  %1799 = vmatpush.bf16.msra.mxu0 %v1538
  %1800 = vmatpush.bf16.msra.mxu0 %v1537
  %1801 = vmatpush.bf16.msra.mxu0 %v1536
  %1802 = vmatmul.bf16.gmra.mxu0 %v1138
  %v1803 = vpop.f32.mrf.mxu0
  %v1804 = vadd.f32 %v1715, %v1803
  %v1805 = vpop.f32.mrf.mxu0
  %v1806 = vadd.f32 %v1717, %v1805
  %1807 = vmatmul.bf16.gmra.mxu0 %v1150
  %v1808 = vpop.f32.mrf.mxu0
  %v1809 = vadd.f32 %v1720, %v1808
  %v1810 = vpop.f32.mrf.mxu0
  %v1811 = vadd.f32 %v1722, %v1810
  %1812 = vmatmul.bf16.gmra.mxu0 %v1162
  %v1813 = vpop.f32.mrf.mxu0
  %v1814 = vadd.f32 %v1725, %v1813
  %v1815 = vpop.f32.mrf.mxu0
  %v1816 = vadd.f32 %v1727, %v1815
  %1817 = vmatmul.bf16.gmra.mxu0 %v1174
  %v1818 = vpop.f32.mrf.mxu0
  %v1819 = vadd.f32 %v1730, %v1818
  %v1820 = vpop.f32.mrf.mxu0
  %v1821 = vadd.f32 %v1732, %v1820
  %1822 = vmatmul.bf16.gmra.mxu0 %v1186
  %v1823 = vpop.f32.mrf.mxu0
  %v1824 = vadd.f32 %v1735, %v1823
  %v1825 = vpop.f32.mrf.mxu0
  %v1826 = vadd.f32 %v1737, %v1825
  %1827 = vmatmul.bf16.gmra.mxu0 %v1198
  %v1828 = vpop.f32.mrf.mxu0
  %v1829 = vadd.f32 %v1740, %v1828
  %v1830 = vpop.f32.mrf.mxu0
  %v1831 = vadd.f32 %v1742, %v1830
  %1832 = vmatmul.bf16.gmra.mxu0 %v1210
  %v1833 = vpop.f32.mrf.mxu0
  %v1834 = vadd.f32 %v1745, %v1833
  %v1835 = vpop.f32.mrf.mxu0
  %v1836 = vadd.f32 %v1747, %v1835
  %1837 = vmatmul.bf16.gmra.mxu0 %v1222
  %v1838 = vpop.f32.mrf.mxu0
  %v1839 = vadd.f32 %v1750, %v1838
  %v1840 = vpop.f32.mrf.mxu0
  %v1841 = vadd.f32 %v1752, %v1840
  %1842 = vmatmul.bf16.gmra.mxu0 %v1234
  %v1843 = vpop.f32.mrf.mxu0
  %v1844 = vadd.f32 %v1755, %v1843
  %v1845 = vpop.f32.mrf.mxu0
  %v1846 = vadd.f32 %v1757, %v1845
  %1847 = vmatmul.bf16.gmra.mxu0 %v1246
  %v1848 = vpop.f32.mrf.mxu0
  %v1849 = vadd.f32 %v1760, %v1848
  %v1850 = vpop.f32.mrf.mxu0
  %v1851 = vadd.f32 %v1762, %v1850
  %1852 = vmatmul.bf16.gmra.mxu0 %v1258
  %v1853 = vpop.f32.mrf.mxu0
  %v1854 = vadd.f32 %v1765, %v1853
  %v1855 = vpop.f32.mrf.mxu0
  %v1856 = vadd.f32 %v1767, %v1855
  %1857 = vmatmul.bf16.gmra.mxu0 %v1270
  %v1858 = vpop.f32.mrf.mxu0
  %v1859 = vadd.f32 %v1770, %v1858
  %v1860 = vpop.f32.mrf.mxu0
  %v1861 = vadd.f32 %v1772, %v1860
  %1862 = vmatmul.bf16.gmra.mxu0 %v1282
  %v1863 = vpop.f32.mrf.mxu0
  %v1864 = vadd.f32 %v1775, %v1863
  %v1865 = vpop.f32.mrf.mxu0
  %v1866 = vadd.f32 %v1777, %v1865
  %1867 = vmatmul.bf16.gmra.mxu0 %v1294
  %v1868 = vpop.f32.mrf.mxu0
  %v1869 = vadd.f32 %v1780, %v1868
  %v1870 = vpop.f32.mrf.mxu0
  %v1871 = vadd.f32 %v1782, %v1870
  %1872 = vmatmul.bf16.gmra.mxu0 %v1306
  %v1873 = vpop.f32.mrf.mxu0
  %v1874 = vadd.f32 %v1785, %v1873
  %v1875 = vpop.f32.mrf.mxu0
  %v1876 = vadd.f32 %v1787, %v1875
  %1877 = vmatmul.bf16.gmra.mxu0 %v1318
  %v1878 = vpop.f32.mrf.mxu0
  %v1879 = vadd.f32 %v1790, %v1878
  %v1880 = vpop.f32.mrf.mxu0
  %v1881 = vadd.f32 %v1792, %v1880
  %1882 = vdwg.mxu0
  %1883 = vmatpush.bf16.msra.mxu0 %v1551
  %1884 = vmatpush.bf16.msra.mxu0 %v1550
  %1885 = vmatpush.bf16.msra.mxu0 %v1549
  %1886 = vmatpush.bf16.msra.mxu0 %v1548
  %1887 = vmatpush.bf16.msra.mxu0 %v1547
  %1888 = vmatpush.bf16.msra.mxu0 %v1546
  %1889 = vmatpush.bf16.msra.mxu0 %v1545
  %1890 = vmatpush.bf16.msra.mxu0 %v1544
  %1891 = vmatmul.bf16.gmra.mxu0 %v1139
  %v1892 = vpop.f32.mrf.mxu0
  %v1893 = vadd.f32 %v1804, %v1892
  %v1894 = vpop.f32.mrf.mxu0
  %v1895 = vadd.f32 %v1806, %v1894
  %1896 = vmatmul.bf16.gmra.mxu0 %v1151
  %v1897 = vpop.f32.mrf.mxu0
  %v1898 = vadd.f32 %v1809, %v1897
  %v1899 = vpop.f32.mrf.mxu0
  %v1900 = vadd.f32 %v1811, %v1899
  %1901 = vmatmul.bf16.gmra.mxu0 %v1163
  %v1902 = vpop.f32.mrf.mxu0
  %v1903 = vadd.f32 %v1814, %v1902
  %v1904 = vpop.f32.mrf.mxu0
  %v1905 = vadd.f32 %v1816, %v1904
  %1906 = vmatmul.bf16.gmra.mxu0 %v1175
  %v1907 = vpop.f32.mrf.mxu0
  %v1908 = vadd.f32 %v1819, %v1907
  %v1909 = vpop.f32.mrf.mxu0
  %v1910 = vadd.f32 %v1821, %v1909
  %1911 = vmatmul.bf16.gmra.mxu0 %v1187
  %v1912 = vpop.f32.mrf.mxu0
  %v1913 = vadd.f32 %v1824, %v1912
  %v1914 = vpop.f32.mrf.mxu0
  %v1915 = vadd.f32 %v1826, %v1914
  %1916 = vmatmul.bf16.gmra.mxu0 %v1199
  %v1917 = vpop.f32.mrf.mxu0
  %v1918 = vadd.f32 %v1829, %v1917
  %v1919 = vpop.f32.mrf.mxu0
  %v1920 = vadd.f32 %v1831, %v1919
  %1921 = vmatmul.bf16.gmra.mxu0 %v1211
  %v1922 = vpop.f32.mrf.mxu0
  %v1923 = vadd.f32 %v1834, %v1922
  %v1924 = vpop.f32.mrf.mxu0
  %v1925 = vadd.f32 %v1836, %v1924
  %1926 = vmatmul.bf16.gmra.mxu0 %v1223
  %v1927 = vpop.f32.mrf.mxu0
  %v1928 = vadd.f32 %v1839, %v1927
  %v1929 = vpop.f32.mrf.mxu0
  %v1930 = vadd.f32 %v1841, %v1929
  %1931 = vmatmul.bf16.gmra.mxu0 %v1235
  %v1932 = vpop.f32.mrf.mxu0
  %v1933 = vadd.f32 %v1844, %v1932
  %v1934 = vpop.f32.mrf.mxu0
  %v1935 = vadd.f32 %v1846, %v1934
  %1936 = vmatmul.bf16.gmra.mxu0 %v1247
  %v1937 = vpop.f32.mrf.mxu0
  %v1938 = vadd.f32 %v1849, %v1937
  %v1939 = vpop.f32.mrf.mxu0
  %v1940 = vadd.f32 %v1851, %v1939
  %1941 = vmatmul.bf16.gmra.mxu0 %v1259
  %v1942 = vpop.f32.mrf.mxu0
  %v1943 = vadd.f32 %v1854, %v1942
  %v1944 = vpop.f32.mrf.mxu0
  %v1945 = vadd.f32 %v1856, %v1944
  %1946 = vmatmul.bf16.gmra.mxu0 %v1271
  %v1947 = vpop.f32.mrf.mxu0
  %v1948 = vadd.f32 %v1859, %v1947
  %v1949 = vpop.f32.mrf.mxu0
  %v1950 = vadd.f32 %v1861, %v1949
  %1951 = vmatmul.bf16.gmra.mxu0 %v1283
  %v1952 = vpop.f32.mrf.mxu0
  %v1953 = vadd.f32 %v1864, %v1952
  %v1954 = vpop.f32.mrf.mxu0
  %v1955 = vadd.f32 %v1866, %v1954
  %1956 = vmatmul.bf16.gmra.mxu0 %v1295
  %v1957 = vpop.f32.mrf.mxu0
  %v1958 = vadd.f32 %v1869, %v1957
  %v1959 = vpop.f32.mrf.mxu0
  %v1960 = vadd.f32 %v1871, %v1959
  %1961 = vmatmul.bf16.gmra.mxu0 %v1307
  %v1962 = vpop.f32.mrf.mxu0
  %v1963 = vadd.f32 %v1874, %v1962
  %v1964 = vpop.f32.mrf.mxu0
  %v1965 = vadd.f32 %v1876, %v1964
  %1966 = vmatmul.bf16.gmra.mxu0 %v1319
  %v1967 = vpop.f32.mrf.mxu0
  %v1968 = vadd.f32 %v1879, %v1967
  %v1969 = vpop.f32.mrf.mxu0
  %v1970 = vadd.f32 %v1881, %v1969
  %1971 = vdwg.mxu0
  %1972 = vmatpush.bf16.msra.mxu0 %v1559
  %1973 = vmatpush.bf16.msra.mxu0 %v1558
  %1974 = vmatpush.bf16.msra.mxu0 %v1557
  %1975 = vmatpush.bf16.msra.mxu0 %v1556
  %1976 = vmatpush.bf16.msra.mxu0 %v1555
  %1977 = vmatpush.bf16.msra.mxu0 %v1554
  %1978 = vmatpush.bf16.msra.mxu0 %v1553
  %1979 = vmatpush.bf16.msra.mxu0 %v1552
  %1980 = vmatmul.bf16.gmra.mxu0 %v1140
  %v1981 = vpop.f32.mrf.mxu0
  %v1982 = vadd.f32 %v1893, %v1981
  %v1983 = vpop.f32.mrf.mxu0
  %v1984 = vadd.f32 %v1895, %v1983
  %1985 = vmatmul.bf16.gmra.mxu0 %v1152
  %v1986 = vpop.f32.mrf.mxu0
  %v1987 = vadd.f32 %v1898, %v1986
  %v1988 = vpop.f32.mrf.mxu0
  %v1989 = vadd.f32 %v1900, %v1988
  %1990 = vmatmul.bf16.gmra.mxu0 %v1164
  %v1991 = vpop.f32.mrf.mxu0
  %v1992 = vadd.f32 %v1903, %v1991
  %v1993 = vpop.f32.mrf.mxu0
  %v1994 = vadd.f32 %v1905, %v1993
  %1995 = vmatmul.bf16.gmra.mxu0 %v1176
  %v1996 = vpop.f32.mrf.mxu0
  %v1997 = vadd.f32 %v1908, %v1996
  %v1998 = vpop.f32.mrf.mxu0
  %v1999 = vadd.f32 %v1910, %v1998
  %2000 = vmatmul.bf16.gmra.mxu0 %v1188
  %v2001 = vpop.f32.mrf.mxu0
  %v2002 = vadd.f32 %v1913, %v2001
  %v2003 = vpop.f32.mrf.mxu0
  %v2004 = vadd.f32 %v1915, %v2003
  %2005 = vmatmul.bf16.gmra.mxu0 %v1200
  %v2006 = vpop.f32.mrf.mxu0
  %v2007 = vadd.f32 %v1918, %v2006
  %v2008 = vpop.f32.mrf.mxu0
  %v2009 = vadd.f32 %v1920, %v2008
  %2010 = vmatmul.bf16.gmra.mxu0 %v1212
  %v2011 = vpop.f32.mrf.mxu0
  %v2012 = vadd.f32 %v1923, %v2011
  %v2013 = vpop.f32.mrf.mxu0
  %v2014 = vadd.f32 %v1925, %v2013
  %2015 = vmatmul.bf16.gmra.mxu0 %v1224
  %v2016 = vpop.f32.mrf.mxu0
  %v2017 = vadd.f32 %v1928, %v2016
  %v2018 = vpop.f32.mrf.mxu0
  %v2019 = vadd.f32 %v1930, %v2018
  %2020 = vmatmul.bf16.gmra.mxu0 %v1236
  %v2021 = vpop.f32.mrf.mxu0
  %v2022 = vadd.f32 %v1933, %v2021
  %v2023 = vpop.f32.mrf.mxu0
  %v2024 = vadd.f32 %v1935, %v2023
  %2025 = vmatmul.bf16.gmra.mxu0 %v1248
  %v2026 = vpop.f32.mrf.mxu0
  %v2027 = vadd.f32 %v1938, %v2026
  %v2028 = vpop.f32.mrf.mxu0
  %v2029 = vadd.f32 %v1940, %v2028
  %2030 = vmatmul.bf16.gmra.mxu0 %v1260
  %v2031 = vpop.f32.mrf.mxu0
  %v2032 = vadd.f32 %v1943, %v2031
  %v2033 = vpop.f32.mrf.mxu0
  %v2034 = vadd.f32 %v1945, %v2033
  %2035 = vmatmul.bf16.gmra.mxu0 %v1272
  %v2036 = vpop.f32.mrf.mxu0
  %v2037 = vadd.f32 %v1948, %v2036
  %v2038 = vpop.f32.mrf.mxu0
  %v2039 = vadd.f32 %v1950, %v2038
  %2040 = vmatmul.bf16.gmra.mxu0 %v1284
  %v2041 = vpop.f32.mrf.mxu0
  %v2042 = vadd.f32 %v1953, %v2041
  %v2043 = vpop.f32.mrf.mxu0
  %v2044 = vadd.f32 %v1955, %v2043
  %2045 = vmatmul.bf16.gmra.mxu0 %v1296
  %v2046 = vpop.f32.mrf.mxu0
  %v2047 = vadd.f32 %v1958, %v2046
  %v2048 = vpop.f32.mrf.mxu0
  %v2049 = vadd.f32 %v1960, %v2048
  %2050 = vmatmul.bf16.gmra.mxu0 %v1308
  %v2051 = vpop.f32.mrf.mxu0
  %v2052 = vadd.f32 %v1963, %v2051
  %v2053 = vpop.f32.mrf.mxu0
  %v2054 = vadd.f32 %v1965, %v2053
  %2055 = vmatmul.bf16.gmra.mxu0 %v1320
  %v2056 = vpop.f32.mrf.mxu0
  %v2057 = vadd.f32 %v1968, %v2056
  %v2058 = vpop.f32.mrf.mxu0
  %v2059 = vadd.f32 %v1970, %v2058
  %2060 = vdwg.mxu0
  %2061 = vmatpush.bf16.msra.mxu0 %v1567
  %2062 = vmatpush.bf16.msra.mxu0 %v1566
  %2063 = vmatpush.bf16.msra.mxu0 %v1565
  %2064 = vmatpush.bf16.msra.mxu0 %v1564
  %2065 = vmatpush.bf16.msra.mxu0 %v1563
  %2066 = vmatpush.bf16.msra.mxu0 %v1562
  %2067 = vmatpush.bf16.msra.mxu0 %v1561
  %2068 = vmatpush.bf16.msra.mxu0 %v1560
  %2069 = vmatmul.bf16.gmra.mxu0 %v1141
  %v2070 = vpop.f32.mrf.mxu0
  %v2071 = vadd.f32 %v1982, %v2070
  %v2072 = vpop.f32.mrf.mxu0
  %v2073 = vadd.f32 %v1984, %v2072
  %2074 = vmatmul.bf16.gmra.mxu0 %v1153
  %v2075 = vpop.f32.mrf.mxu0
  %v2076 = vadd.f32 %v1987, %v2075
  %v2077 = vpop.f32.mrf.mxu0
  %v2078 = vadd.f32 %v1989, %v2077
  %2079 = vmatmul.bf16.gmra.mxu0 %v1165
  %v2080 = vpop.f32.mrf.mxu0
  %v2081 = vadd.f32 %v1992, %v2080
  %v2082 = vpop.f32.mrf.mxu0
  %v2083 = vadd.f32 %v1994, %v2082
  %2084 = vmatmul.bf16.gmra.mxu0 %v1177
  %v2085 = vpop.f32.mrf.mxu0
  %v2086 = vadd.f32 %v1997, %v2085
  %v2087 = vpop.f32.mrf.mxu0
  %v2088 = vadd.f32 %v1999, %v2087
  %2089 = vmatmul.bf16.gmra.mxu0 %v1189
  %v2090 = vpop.f32.mrf.mxu0
  %v2091 = vadd.f32 %v2002, %v2090
  %v2092 = vpop.f32.mrf.mxu0
  %v2093 = vadd.f32 %v2004, %v2092
  %2094 = vmatmul.bf16.gmra.mxu0 %v1201
  %v2095 = vpop.f32.mrf.mxu0
  %v2096 = vadd.f32 %v2007, %v2095
  %v2097 = vpop.f32.mrf.mxu0
  %v2098 = vadd.f32 %v2009, %v2097
  %2099 = vmatmul.bf16.gmra.mxu0 %v1213
  %v2100 = vpop.f32.mrf.mxu0
  %v2101 = vadd.f32 %v2012, %v2100
  %v2102 = vpop.f32.mrf.mxu0
  %v2103 = vadd.f32 %v2014, %v2102
  %2104 = vmatmul.bf16.gmra.mxu0 %v1225
  %v2105 = vpop.f32.mrf.mxu0
  %v2106 = vadd.f32 %v2017, %v2105
  %v2107 = vpop.f32.mrf.mxu0
  %v2108 = vadd.f32 %v2019, %v2107
  %2109 = vmatmul.bf16.gmra.mxu0 %v1237
  %v2110 = vpop.f32.mrf.mxu0
  %v2111 = vadd.f32 %v2022, %v2110
  %v2112 = vpop.f32.mrf.mxu0
  %v2113 = vadd.f32 %v2024, %v2112
  %2114 = vmatmul.bf16.gmra.mxu0 %v1249
  %v2115 = vpop.f32.mrf.mxu0
  %v2116 = vadd.f32 %v2027, %v2115
  %v2117 = vpop.f32.mrf.mxu0
  %v2118 = vadd.f32 %v2029, %v2117
  %2119 = vmatmul.bf16.gmra.mxu0 %v1261
  %v2120 = vpop.f32.mrf.mxu0
  %v2121 = vadd.f32 %v2032, %v2120
  %v2122 = vpop.f32.mrf.mxu0
  %v2123 = vadd.f32 %v2034, %v2122
  %2124 = vmatmul.bf16.gmra.mxu0 %v1273
  %v2125 = vpop.f32.mrf.mxu0
  %v2126 = vadd.f32 %v2037, %v2125
  %v2127 = vpop.f32.mrf.mxu0
  %v2128 = vadd.f32 %v2039, %v2127
  %2129 = vmatmul.bf16.gmra.mxu0 %v1285
  %v2130 = vpop.f32.mrf.mxu0
  %v2131 = vadd.f32 %v2042, %v2130
  %v2132 = vpop.f32.mrf.mxu0
  %v2133 = vadd.f32 %v2044, %v2132
  %2134 = vmatmul.bf16.gmra.mxu0 %v1297
  %v2135 = vpop.f32.mrf.mxu0
  %v2136 = vadd.f32 %v2047, %v2135
  %v2137 = vpop.f32.mrf.mxu0
  %v2138 = vadd.f32 %v2049, %v2137
  %2139 = vmatmul.bf16.gmra.mxu0 %v1309
  %v2140 = vpop.f32.mrf.mxu0
  %v2141 = vadd.f32 %v2052, %v2140
  %v2142 = vpop.f32.mrf.mxu0
  %v2143 = vadd.f32 %v2054, %v2142
  %2144 = vmatmul.bf16.gmra.mxu0 %v1321
  %v2145 = vpop.f32.mrf.mxu0
  %v2146 = vadd.f32 %v2057, %v2145
  %v2147 = vpop.f32.mrf.mxu0
  %v2148 = vadd.f32 %v2059, %v2147
  %2149 = vdwg.mxu0
  %2150 = vmatpush.bf16.msra.mxu0 %v1575
  %2151 = vmatpush.bf16.msra.mxu0 %v1574
  %2152 = vmatpush.bf16.msra.mxu0 %v1573
  %2153 = vmatpush.bf16.msra.mxu0 %v1572
  %2154 = vmatpush.bf16.msra.mxu0 %v1571
  %2155 = vmatpush.bf16.msra.mxu0 %v1570
  %2156 = vmatpush.bf16.msra.mxu0 %v1569
  %2157 = vmatpush.bf16.msra.mxu0 %v1568
  %2158 = vmatmul.bf16.gmra.mxu0 %v1142
  %v2159 = vpop.f32.mrf.mxu0
  %v2160 = vadd.f32 %v2071, %v2159
  %v2161 = vpop.f32.mrf.mxu0
  %v2162 = vadd.f32 %v2073, %v2161
  %2163 = vmatmul.bf16.gmra.mxu0 %v1154
  %v2164 = vpop.f32.mrf.mxu0
  %v2165 = vadd.f32 %v2076, %v2164
  %v2166 = vpop.f32.mrf.mxu0
  %v2167 = vadd.f32 %v2078, %v2166
  %2168 = vmatmul.bf16.gmra.mxu0 %v1166
  %v2169 = vpop.f32.mrf.mxu0
  %v2170 = vadd.f32 %v2081, %v2169
  %v2171 = vpop.f32.mrf.mxu0
  %v2172 = vadd.f32 %v2083, %v2171
  %2173 = vmatmul.bf16.gmra.mxu0 %v1178
  %v2174 = vpop.f32.mrf.mxu0
  %v2175 = vadd.f32 %v2086, %v2174
  %v2176 = vpop.f32.mrf.mxu0
  %v2177 = vadd.f32 %v2088, %v2176
  %2178 = vmatmul.bf16.gmra.mxu0 %v1190
  %v2179 = vpop.f32.mrf.mxu0
  %v2180 = vadd.f32 %v2091, %v2179
  %v2181 = vpop.f32.mrf.mxu0
  %v2182 = vadd.f32 %v2093, %v2181
  %2183 = vmatmul.bf16.gmra.mxu0 %v1202
  %v2184 = vpop.f32.mrf.mxu0
  %v2185 = vadd.f32 %v2096, %v2184
  %v2186 = vpop.f32.mrf.mxu0
  %v2187 = vadd.f32 %v2098, %v2186
  %2188 = vmatmul.bf16.gmra.mxu0 %v1214
  %v2189 = vpop.f32.mrf.mxu0
  %v2190 = vadd.f32 %v2101, %v2189
  %v2191 = vpop.f32.mrf.mxu0
  %v2192 = vadd.f32 %v2103, %v2191
  %2193 = vmatmul.bf16.gmra.mxu0 %v1226
  %v2194 = vpop.f32.mrf.mxu0
  %v2195 = vadd.f32 %v2106, %v2194
  %v2196 = vpop.f32.mrf.mxu0
  %v2197 = vadd.f32 %v2108, %v2196
  %2198 = vmatmul.bf16.gmra.mxu0 %v1238
  %v2199 = vpop.f32.mrf.mxu0
  %v2200 = vadd.f32 %v2111, %v2199
  %v2201 = vpop.f32.mrf.mxu0
  %v2202 = vadd.f32 %v2113, %v2201
  %2203 = vmatmul.bf16.gmra.mxu0 %v1250
  %v2204 = vpop.f32.mrf.mxu0
  %v2205 = vadd.f32 %v2116, %v2204
  %v2206 = vpop.f32.mrf.mxu0
  %v2207 = vadd.f32 %v2118, %v2206
  %2208 = vmatmul.bf16.gmra.mxu0 %v1262
  %v2209 = vpop.f32.mrf.mxu0
  %v2210 = vadd.f32 %v2121, %v2209
  %v2211 = vpop.f32.mrf.mxu0
  %v2212 = vadd.f32 %v2123, %v2211
  %2213 = vmatmul.bf16.gmra.mxu0 %v1274
  %v2214 = vpop.f32.mrf.mxu0
  %v2215 = vadd.f32 %v2126, %v2214
  %v2216 = vpop.f32.mrf.mxu0
  %v2217 = vadd.f32 %v2128, %v2216
  %2218 = vmatmul.bf16.gmra.mxu0 %v1286
  %v2219 = vpop.f32.mrf.mxu0
  %v2220 = vadd.f32 %v2131, %v2219
  %v2221 = vpop.f32.mrf.mxu0
  %v2222 = vadd.f32 %v2133, %v2221
  %2223 = vmatmul.bf16.gmra.mxu0 %v1298
  %v2224 = vpop.f32.mrf.mxu0
  %v2225 = vadd.f32 %v2136, %v2224
  %v2226 = vpop.f32.mrf.mxu0
  %v2227 = vadd.f32 %v2138, %v2226
  %2228 = vmatmul.bf16.gmra.mxu0 %v1310
  %v2229 = vpop.f32.mrf.mxu0
  %v2230 = vadd.f32 %v2141, %v2229
  %v2231 = vpop.f32.mrf.mxu0
  %v2232 = vadd.f32 %v2143, %v2231
  %2233 = vmatmul.bf16.gmra.mxu0 %v1322
  %v2234 = vpop.f32.mrf.mxu0
  %v2235 = vadd.f32 %v2146, %v2234
  %v2236 = vpop.f32.mrf.mxu0
  %v2237 = vadd.f32 %v2148, %v2236
  %2238 = vdwg.mxu0
  %2239 = vmatpush.bf16.msra.mxu0 %v1583
  %2240 = vmatpush.bf16.msra.mxu0 %v1582
  %2241 = vmatpush.bf16.msra.mxu0 %v1581
  %2242 = vmatpush.bf16.msra.mxu0 %v1580
  %2243 = vmatpush.bf16.msra.mxu0 %v1579
  %2244 = vmatpush.bf16.msra.mxu0 %v1578
  %2245 = vmatpush.bf16.msra.mxu0 %v1577
  %2246 = vmatpush.bf16.msra.mxu0 %v1576
  %2247 = vmatmul.bf16.gmra.mxu0 %v1143
  %v2248 = vpop.f32.mrf.mxu0
  %v2249 = vadd.f32 %v2160, %v2248
  %v2250 = vpop.f32.mrf.mxu0
  %v2251 = vadd.f32 %v2162, %v2250
  %2252 = vmatmul.bf16.gmra.mxu0 %v1155
  %v2253 = vpop.f32.mrf.mxu0
  %v2254 = vadd.f32 %v2165, %v2253
  %v2255 = vpop.f32.mrf.mxu0
  %v2256 = vadd.f32 %v2167, %v2255
  %2257 = vmatmul.bf16.gmra.mxu0 %v1167
  %v2258 = vpop.f32.mrf.mxu0
  %v2259 = vadd.f32 %v2170, %v2258
  %v2260 = vpop.f32.mrf.mxu0
  %v2261 = vadd.f32 %v2172, %v2260
  %2262 = vmatmul.bf16.gmra.mxu0 %v1179
  %v2263 = vpop.f32.mrf.mxu0
  %v2264 = vadd.f32 %v2175, %v2263
  %v2265 = vpop.f32.mrf.mxu0
  %v2266 = vadd.f32 %v2177, %v2265
  %2267 = vmatmul.bf16.gmra.mxu0 %v1191
  %v2268 = vpop.f32.mrf.mxu0
  %v2269 = vadd.f32 %v2180, %v2268
  %v2270 = vpop.f32.mrf.mxu0
  %v2271 = vadd.f32 %v2182, %v2270
  %2272 = vmatmul.bf16.gmra.mxu0 %v1203
  %v2273 = vpop.f32.mrf.mxu0
  %v2274 = vadd.f32 %v2185, %v2273
  %v2275 = vpop.f32.mrf.mxu0
  %v2276 = vadd.f32 %v2187, %v2275
  %2277 = vmatmul.bf16.gmra.mxu0 %v1215
  %v2278 = vpop.f32.mrf.mxu0
  %v2279 = vadd.f32 %v2190, %v2278
  %v2280 = vpop.f32.mrf.mxu0
  %v2281 = vadd.f32 %v2192, %v2280
  %2282 = vmatmul.bf16.gmra.mxu0 %v1227
  %v2283 = vpop.f32.mrf.mxu0
  %v2284 = vadd.f32 %v2195, %v2283
  %v2285 = vpop.f32.mrf.mxu0
  %v2286 = vadd.f32 %v2197, %v2285
  %2287 = vmatmul.bf16.gmra.mxu0 %v1239
  %v2288 = vpop.f32.mrf.mxu0
  %v2289 = vadd.f32 %v2200, %v2288
  %v2290 = vpop.f32.mrf.mxu0
  %v2291 = vadd.f32 %v2202, %v2290
  %2292 = vmatmul.bf16.gmra.mxu0 %v1251
  %v2293 = vpop.f32.mrf.mxu0
  %v2294 = vadd.f32 %v2205, %v2293
  %v2295 = vpop.f32.mrf.mxu0
  %v2296 = vadd.f32 %v2207, %v2295
  %2297 = vmatmul.bf16.gmra.mxu0 %v1263
  %v2298 = vpop.f32.mrf.mxu0
  %v2299 = vadd.f32 %v2210, %v2298
  %v2300 = vpop.f32.mrf.mxu0
  %v2301 = vadd.f32 %v2212, %v2300
  %2302 = vmatmul.bf16.gmra.mxu0 %v1275
  %v2303 = vpop.f32.mrf.mxu0
  %v2304 = vadd.f32 %v2215, %v2303
  %v2305 = vpop.f32.mrf.mxu0
  %v2306 = vadd.f32 %v2217, %v2305
  %2307 = vmatmul.bf16.gmra.mxu0 %v1287
  %v2308 = vpop.f32.mrf.mxu0
  %v2309 = vadd.f32 %v2220, %v2308
  %v2310 = vpop.f32.mrf.mxu0
  %v2311 = vadd.f32 %v2222, %v2310
  %2312 = vmatmul.bf16.gmra.mxu0 %v1299
  %v2313 = vpop.f32.mrf.mxu0
  %v2314 = vadd.f32 %v2225, %v2313
  %v2315 = vpop.f32.mrf.mxu0
  %v2316 = vadd.f32 %v2227, %v2315
  %2317 = vmatmul.bf16.gmra.mxu0 %v1311
  %v2318 = vpop.f32.mrf.mxu0
  %v2319 = vadd.f32 %v2230, %v2318
  %v2320 = vpop.f32.mrf.mxu0
  %v2321 = vadd.f32 %v2232, %v2320
  %2322 = vmatmul.bf16.gmra.mxu0 %v1323
  %v2323 = vpop.f32.mrf.mxu0
  %v2324 = vadd.f32 %v2235, %v2323
  %v2325 = vpop.f32.mrf.mxu0
  %v2326 = vadd.f32 %v2237, %v2325
  %2327 = vdwg.mxu0
  %2328 = vmatpush.bf16.msra.mxu0 %v1591
  %2329 = vmatpush.bf16.msra.mxu0 %v1590
  %2330 = vmatpush.bf16.msra.mxu0 %v1589
  %2331 = vmatpush.bf16.msra.mxu0 %v1588
  %2332 = vmatpush.bf16.msra.mxu0 %v1587
  %2333 = vmatpush.bf16.msra.mxu0 %v1586
  %2334 = vmatpush.bf16.msra.mxu0 %v1585
  %2335 = vmatpush.bf16.msra.mxu0 %v1584
  %2336 = vmatmul.bf16.gmra.mxu0 %v1144
  %v2337 = vpop.f32.mrf.mxu0
  %v2338 = vadd.f32 %v2249, %v2337
  %v2339 = vpop.f32.mrf.mxu0
  %v2340 = vadd.f32 %v2251, %v2339
  %2341 = vmatmul.bf16.gmra.mxu0 %v1156
  %v2342 = vpop.f32.mrf.mxu0
  %v2343 = vadd.f32 %v2254, %v2342
  %v2344 = vpop.f32.mrf.mxu0
  %v2345 = vadd.f32 %v2256, %v2344
  %2346 = vmatmul.bf16.gmra.mxu0 %v1168
  %v2347 = vpop.f32.mrf.mxu0
  %v2348 = vadd.f32 %v2259, %v2347
  %v2349 = vpop.f32.mrf.mxu0
  %v2350 = vadd.f32 %v2261, %v2349
  %2351 = vmatmul.bf16.gmra.mxu0 %v1180
  %v2352 = vpop.f32.mrf.mxu0
  %v2353 = vadd.f32 %v2264, %v2352
  %v2354 = vpop.f32.mrf.mxu0
  %v2355 = vadd.f32 %v2266, %v2354
  %2356 = vmatmul.bf16.gmra.mxu0 %v1192
  %v2357 = vpop.f32.mrf.mxu0
  %v2358 = vadd.f32 %v2269, %v2357
  %v2359 = vpop.f32.mrf.mxu0
  %v2360 = vadd.f32 %v2271, %v2359
  %2361 = vmatmul.bf16.gmra.mxu0 %v1204
  %v2362 = vpop.f32.mrf.mxu0
  %v2363 = vadd.f32 %v2274, %v2362
  %v2364 = vpop.f32.mrf.mxu0
  %v2365 = vadd.f32 %v2276, %v2364
  %2366 = vmatmul.bf16.gmra.mxu0 %v1216
  %v2367 = vpop.f32.mrf.mxu0
  %v2368 = vadd.f32 %v2279, %v2367
  %v2369 = vpop.f32.mrf.mxu0
  %v2370 = vadd.f32 %v2281, %v2369
  %2371 = vmatmul.bf16.gmra.mxu0 %v1228
  %v2372 = vpop.f32.mrf.mxu0
  %v2373 = vadd.f32 %v2284, %v2372
  %v2374 = vpop.f32.mrf.mxu0
  %v2375 = vadd.f32 %v2286, %v2374
  %2376 = vmatmul.bf16.gmra.mxu0 %v1240
  %v2377 = vpop.f32.mrf.mxu0
  %v2378 = vadd.f32 %v2289, %v2377
  %v2379 = vpop.f32.mrf.mxu0
  %v2380 = vadd.f32 %v2291, %v2379
  %2381 = vmatmul.bf16.gmra.mxu0 %v1252
  %v2382 = vpop.f32.mrf.mxu0
  %v2383 = vadd.f32 %v2294, %v2382
  %v2384 = vpop.f32.mrf.mxu0
  %v2385 = vadd.f32 %v2296, %v2384
  %2386 = vmatmul.bf16.gmra.mxu0 %v1264
  %v2387 = vpop.f32.mrf.mxu0
  %v2388 = vadd.f32 %v2299, %v2387
  %v2389 = vpop.f32.mrf.mxu0
  %v2390 = vadd.f32 %v2301, %v2389
  %2391 = vmatmul.bf16.gmra.mxu0 %v1276
  %v2392 = vpop.f32.mrf.mxu0
  %v2393 = vadd.f32 %v2304, %v2392
  %v2394 = vpop.f32.mrf.mxu0
  %v2395 = vadd.f32 %v2306, %v2394
  %2396 = vmatmul.bf16.gmra.mxu0 %v1288
  %v2397 = vpop.f32.mrf.mxu0
  %v2398 = vadd.f32 %v2309, %v2397
  %v2399 = vpop.f32.mrf.mxu0
  %v2400 = vadd.f32 %v2311, %v2399
  %2401 = vmatmul.bf16.gmra.mxu0 %v1300
  %v2402 = vpop.f32.mrf.mxu0
  %v2403 = vadd.f32 %v2314, %v2402
  %v2404 = vpop.f32.mrf.mxu0
  %v2405 = vadd.f32 %v2316, %v2404
  %2406 = vmatmul.bf16.gmra.mxu0 %v1312
  %v2407 = vpop.f32.mrf.mxu0
  %v2408 = vadd.f32 %v2319, %v2407
  %v2409 = vpop.f32.mrf.mxu0
  %v2410 = vadd.f32 %v2321, %v2409
  %2411 = vmatmul.bf16.gmra.mxu0 %v1324
  %v2412 = vpop.f32.mrf.mxu0
  %v2413 = vadd.f32 %v2324, %v2412
  %v2414 = vpop.f32.mrf.mxu0
  %v2415 = vadd.f32 %v2326, %v2414
  %2416 = vdwg.mxu0
  %2417 = vmatpush.bf16.msra.mxu0 %v1599
  %2418 = vmatpush.bf16.msra.mxu0 %v1598
  %2419 = vmatpush.bf16.msra.mxu0 %v1597
  %2420 = vmatpush.bf16.msra.mxu0 %v1596
  %2421 = vmatpush.bf16.msra.mxu0 %v1595
  %2422 = vmatpush.bf16.msra.mxu0 %v1594
  %2423 = vmatpush.bf16.msra.mxu0 %v1593
  %2424 = vmatpush.bf16.msra.mxu0 %v1592
  %2425 = vmatmul.bf16.gmra.mxu0 %v1145
  %v2426 = vpop.f32.mrf.mxu0
  %v2427 = vadd.f32 %v2338, %v2426
  %v2428 = vpop.f32.mrf.mxu0
  %v2429 = vadd.f32 %v2340, %v2428
  %2430 = vmatmul.bf16.gmra.mxu0 %v1157
  %v2431 = vpop.f32.mrf.mxu0
  %v2432 = vadd.f32 %v2343, %v2431
  %v2433 = vpop.f32.mrf.mxu0
  %v2434 = vadd.f32 %v2345, %v2433
  %2435 = vmatmul.bf16.gmra.mxu0 %v1169
  %v2436 = vpop.f32.mrf.mxu0
  %v2437 = vadd.f32 %v2348, %v2436
  %v2438 = vpop.f32.mrf.mxu0
  %v2439 = vadd.f32 %v2350, %v2438
  %2440 = vmatmul.bf16.gmra.mxu0 %v1181
  %v2441 = vpop.f32.mrf.mxu0
  %v2442 = vadd.f32 %v2353, %v2441
  %v2443 = vpop.f32.mrf.mxu0
  %v2444 = vadd.f32 %v2355, %v2443
  %2445 = vmatmul.bf16.gmra.mxu0 %v1193
  %v2446 = vpop.f32.mrf.mxu0
  %v2447 = vadd.f32 %v2358, %v2446
  %v2448 = vpop.f32.mrf.mxu0
  %v2449 = vadd.f32 %v2360, %v2448
  %2450 = vmatmul.bf16.gmra.mxu0 %v1205
  %v2451 = vpop.f32.mrf.mxu0
  %v2452 = vadd.f32 %v2363, %v2451
  %v2453 = vpop.f32.mrf.mxu0
  %v2454 = vadd.f32 %v2365, %v2453
  %2455 = vmatmul.bf16.gmra.mxu0 %v1217
  %v2456 = vpop.f32.mrf.mxu0
  %v2457 = vadd.f32 %v2368, %v2456
  %v2458 = vpop.f32.mrf.mxu0
  %v2459 = vadd.f32 %v2370, %v2458
  %2460 = vmatmul.bf16.gmra.mxu0 %v1229
  %v2461 = vpop.f32.mrf.mxu0
  %v2462 = vadd.f32 %v2373, %v2461
  %v2463 = vpop.f32.mrf.mxu0
  %v2464 = vadd.f32 %v2375, %v2463
  %2465 = vmatmul.bf16.gmra.mxu0 %v1241
  %v2466 = vpop.f32.mrf.mxu0
  %v2467 = vadd.f32 %v2378, %v2466
  %v2468 = vpop.f32.mrf.mxu0
  %v2469 = vadd.f32 %v2380, %v2468
  %2470 = vmatmul.bf16.gmra.mxu0 %v1253
  %v2471 = vpop.f32.mrf.mxu0
  %v2472 = vadd.f32 %v2383, %v2471
  %v2473 = vpop.f32.mrf.mxu0
  %v2474 = vadd.f32 %v2385, %v2473
  %2475 = vmatmul.bf16.gmra.mxu0 %v1265
  %v2476 = vpop.f32.mrf.mxu0
  %v2477 = vadd.f32 %v2388, %v2476
  %v2478 = vpop.f32.mrf.mxu0
  %v2479 = vadd.f32 %v2390, %v2478
  %2480 = vmatmul.bf16.gmra.mxu0 %v1277
  %v2481 = vpop.f32.mrf.mxu0
  %v2482 = vadd.f32 %v2393, %v2481
  %v2483 = vpop.f32.mrf.mxu0
  %v2484 = vadd.f32 %v2395, %v2483
  %2485 = vmatmul.bf16.gmra.mxu0 %v1289
  %v2486 = vpop.f32.mrf.mxu0
  %v2487 = vadd.f32 %v2398, %v2486
  %v2488 = vpop.f32.mrf.mxu0
  %v2489 = vadd.f32 %v2400, %v2488
  %2490 = vmatmul.bf16.gmra.mxu0 %v1301
  %v2491 = vpop.f32.mrf.mxu0
  %v2492 = vadd.f32 %v2403, %v2491
  %v2493 = vpop.f32.mrf.mxu0
  %v2494 = vadd.f32 %v2405, %v2493
  %2495 = vmatmul.bf16.gmra.mxu0 %v1313
  %v2496 = vpop.f32.mrf.mxu0
  %v2497 = vadd.f32 %v2408, %v2496
  %v2498 = vpop.f32.mrf.mxu0
  %v2499 = vadd.f32 %v2410, %v2498
  %2500 = vmatmul.bf16.gmra.mxu0 %v1325
  %v2501 = vpop.f32.mrf.mxu0
  %v2502 = vadd.f32 %v2413, %v2501
  %v2503 = vpop.f32.mrf.mxu0
  %v2504 = vadd.f32 %v2415, %v2503
  %2505 = vdwg.mxu0
  %2506 = vmatpush.bf16.msra.mxu0 %v1607
  %2507 = vmatpush.bf16.msra.mxu0 %v1606
  %2508 = vmatpush.bf16.msra.mxu0 %v1605
  %2509 = vmatpush.bf16.msra.mxu0 %v1604
  %2510 = vmatpush.bf16.msra.mxu0 %v1603
  %2511 = vmatpush.bf16.msra.mxu0 %v1602
  %2512 = vmatpush.bf16.msra.mxu0 %v1601
  %2513 = vmatpush.bf16.msra.mxu0 %v1600
  %2514 = vmatmul.bf16.gmra.mxu0 %v1146
  %v2515 = vpop.f32.mrf.mxu0
  %v2516 = vadd.f32 %v2427, %v2515
  %v2517 = vpop.f32.mrf.mxu0
  %v2518 = vadd.f32 %v2429, %v2517
  %2519 = vmatmul.bf16.gmra.mxu0 %v1158
  %v2520 = vpop.f32.mrf.mxu0
  %v2521 = vadd.f32 %v2432, %v2520
  %v2522 = vpop.f32.mrf.mxu0
  %v2523 = vadd.f32 %v2434, %v2522
  %2524 = vmatmul.bf16.gmra.mxu0 %v1170
  %v2525 = vpop.f32.mrf.mxu0
  %v2526 = vadd.f32 %v2437, %v2525
  %v2527 = vpop.f32.mrf.mxu0
  %v2528 = vadd.f32 %v2439, %v2527
  %2529 = vmatmul.bf16.gmra.mxu0 %v1182
  %v2530 = vpop.f32.mrf.mxu0
  %v2531 = vadd.f32 %v2442, %v2530
  %v2532 = vpop.f32.mrf.mxu0
  %v2533 = vadd.f32 %v2444, %v2532
  %2534 = vmatmul.bf16.gmra.mxu0 %v1194
  %v2535 = vpop.f32.mrf.mxu0
  %v2536 = vadd.f32 %v2447, %v2535
  %v2537 = vpop.f32.mrf.mxu0
  %v2538 = vadd.f32 %v2449, %v2537
  %2539 = vmatmul.bf16.gmra.mxu0 %v1206
  %v2540 = vpop.f32.mrf.mxu0
  %v2541 = vadd.f32 %v2452, %v2540
  %v2542 = vpop.f32.mrf.mxu0
  %v2543 = vadd.f32 %v2454, %v2542
  %2544 = vmatmul.bf16.gmra.mxu0 %v1218
  %v2545 = vpop.f32.mrf.mxu0
  %v2546 = vadd.f32 %v2457, %v2545
  %v2547 = vpop.f32.mrf.mxu0
  %v2548 = vadd.f32 %v2459, %v2547
  %2549 = vmatmul.bf16.gmra.mxu0 %v1230
  %v2550 = vpop.f32.mrf.mxu0
  %v2551 = vadd.f32 %v2462, %v2550
  %v2552 = vpop.f32.mrf.mxu0
  %v2553 = vadd.f32 %v2464, %v2552
  %2554 = vmatmul.bf16.gmra.mxu0 %v1242
  %v2555 = vpop.f32.mrf.mxu0
  %v2556 = vadd.f32 %v2467, %v2555
  %v2557 = vpop.f32.mrf.mxu0
  %v2558 = vadd.f32 %v2469, %v2557
  %2559 = vmatmul.bf16.gmra.mxu0 %v1254
  %v2560 = vpop.f32.mrf.mxu0
  %v2561 = vadd.f32 %v2472, %v2560
  %v2562 = vpop.f32.mrf.mxu0
  %v2563 = vadd.f32 %v2474, %v2562
  %2564 = vmatmul.bf16.gmra.mxu0 %v1266
  %v2565 = vpop.f32.mrf.mxu0
  %v2566 = vadd.f32 %v2477, %v2565
  %v2567 = vpop.f32.mrf.mxu0
  %v2568 = vadd.f32 %v2479, %v2567
  %2569 = vmatmul.bf16.gmra.mxu0 %v1278
  %v2570 = vpop.f32.mrf.mxu0
  %v2571 = vadd.f32 %v2482, %v2570
  %v2572 = vpop.f32.mrf.mxu0
  %v2573 = vadd.f32 %v2484, %v2572
  %2574 = vmatmul.bf16.gmra.mxu0 %v1290
  %v2575 = vpop.f32.mrf.mxu0
  %v2576 = vadd.f32 %v2487, %v2575
  %v2577 = vpop.f32.mrf.mxu0
  %v2578 = vadd.f32 %v2489, %v2577
  %2579 = vmatmul.bf16.gmra.mxu0 %v1302
  %v2580 = vpop.f32.mrf.mxu0
  %v2581 = vadd.f32 %v2492, %v2580
  %v2582 = vpop.f32.mrf.mxu0
  %v2583 = vadd.f32 %v2494, %v2582
  %2584 = vmatmul.bf16.gmra.mxu0 %v1314
  %v2585 = vpop.f32.mrf.mxu0
  %v2586 = vadd.f32 %v2497, %v2585
  %v2587 = vpop.f32.mrf.mxu0
  %v2588 = vadd.f32 %v2499, %v2587
  %2589 = vmatmul.bf16.gmra.mxu0 %v1326
  %v2590 = vpop.f32.mrf.mxu0
  %v2591 = vadd.f32 %v2502, %v2590
  %v2592 = vpop.f32.mrf.mxu0
  %v2593 = vadd.f32 %v2504, %v2592
  %2594 = vdwg.mxu0
  %2595 = vmatpush.bf16.msra.mxu0 %v1615
  %2596 = vmatpush.bf16.msra.mxu0 %v1614
  %2597 = vmatpush.bf16.msra.mxu0 %v1613
  %2598 = vmatpush.bf16.msra.mxu0 %v1612
  %2599 = vmatpush.bf16.msra.mxu0 %v1611
  %2600 = vmatpush.bf16.msra.mxu0 %v1610
  %2601 = vmatpush.bf16.msra.mxu0 %v1609
  %2602 = vmatpush.bf16.msra.mxu0 %v1608
  %2603 = vmatmul.bf16.gmra.mxu0 %v1147
  %v2604 = vpop.f32.mrf.mxu0
  %v2605 = vadd.f32 %v2516, %v2604
  %v2606 = vpop.f32.mrf.mxu0
  %v2607 = vadd.f32 %v2518, %v2606
  %2608 = vmatmul.bf16.gmra.mxu0 %v1159
  %v2609 = vpop.f32.mrf.mxu0
  %v2610 = vadd.f32 %v2521, %v2609
  %v2611 = vpop.f32.mrf.mxu0
  %v2612 = vadd.f32 %v2523, %v2611
  %2613 = vmatmul.bf16.gmra.mxu0 %v1171
  %v2614 = vpop.f32.mrf.mxu0
  %v2615 = vadd.f32 %v2526, %v2614
  %v2616 = vpop.f32.mrf.mxu0
  %v2617 = vadd.f32 %v2528, %v2616
  %2618 = vmatmul.bf16.gmra.mxu0 %v1183
  %v2619 = vpop.f32.mrf.mxu0
  %v2620 = vadd.f32 %v2531, %v2619
  %v2621 = vpop.f32.mrf.mxu0
  %v2622 = vadd.f32 %v2533, %v2621
  %2623 = vmatmul.bf16.gmra.mxu0 %v1195
  %v2624 = vpop.f32.mrf.mxu0
  %v2625 = vadd.f32 %v2536, %v2624
  %v2626 = vpop.f32.mrf.mxu0
  %v2627 = vadd.f32 %v2538, %v2626
  %2628 = vmatmul.bf16.gmra.mxu0 %v1207
  %v2629 = vpop.f32.mrf.mxu0
  %v2630 = vadd.f32 %v2541, %v2629
  %v2631 = vpop.f32.mrf.mxu0
  %v2632 = vadd.f32 %v2543, %v2631
  %2633 = vmatmul.bf16.gmra.mxu0 %v1219
  %v2634 = vpop.f32.mrf.mxu0
  %v2635 = vadd.f32 %v2546, %v2634
  %v2636 = vpop.f32.mrf.mxu0
  %v2637 = vadd.f32 %v2548, %v2636
  %2638 = vmatmul.bf16.gmra.mxu0 %v1231
  %v2639 = vpop.f32.mrf.mxu0
  %v2640 = vadd.f32 %v2551, %v2639
  %v2641 = vpop.f32.mrf.mxu0
  %v2642 = vadd.f32 %v2553, %v2641
  %2643 = vmatmul.bf16.gmra.mxu0 %v1243
  %v2644 = vpop.f32.mrf.mxu0
  %v2645 = vadd.f32 %v2556, %v2644
  %v2646 = vpop.f32.mrf.mxu0
  %v2647 = vadd.f32 %v2558, %v2646
  %2648 = vmatmul.bf16.gmra.mxu0 %v1255
  %v2649 = vpop.f32.mrf.mxu0
  %v2650 = vadd.f32 %v2561, %v2649
  %v2651 = vpop.f32.mrf.mxu0
  %v2652 = vadd.f32 %v2563, %v2651
  %2653 = vmatmul.bf16.gmra.mxu0 %v1267
  %v2654 = vpop.f32.mrf.mxu0
  %v2655 = vadd.f32 %v2566, %v2654
  %v2656 = vpop.f32.mrf.mxu0
  %v2657 = vadd.f32 %v2568, %v2656
  %2658 = vmatmul.bf16.gmra.mxu0 %v1279
  %v2659 = vpop.f32.mrf.mxu0
  %v2660 = vadd.f32 %v2571, %v2659
  %v2661 = vpop.f32.mrf.mxu0
  %v2662 = vadd.f32 %v2573, %v2661
  %2663 = vmatmul.bf16.gmra.mxu0 %v1291
  %v2664 = vpop.f32.mrf.mxu0
  %v2665 = vadd.f32 %v2576, %v2664
  %v2666 = vpop.f32.mrf.mxu0
  %v2667 = vadd.f32 %v2578, %v2666
  %2668 = vmatmul.bf16.gmra.mxu0 %v1303
  %v2669 = vpop.f32.mrf.mxu0
  %v2670 = vadd.f32 %v2581, %v2669
  %v2671 = vpop.f32.mrf.mxu0
  %v2672 = vadd.f32 %v2583, %v2671
  %2673 = vmatmul.bf16.gmra.mxu0 %v1315
  %v2674 = vpop.f32.mrf.mxu0
  %v2675 = vadd.f32 %v2586, %v2674
  %v2676 = vpop.f32.mrf.mxu0
  %v2677 = vadd.f32 %v2588, %v2676
  %2678 = vmatmul.bf16.gmra.mxu0 %v1327
  %v2679 = vpop.f32.mrf.mxu0
  %v2680 = vadd.f32 %v2591, %v2679
  %v2681 = vpop.f32.mrf.mxu0
  %v2682 = vadd.f32 %v2593, %v2681
  %2683 = vdwg.mxu0
  %vm2684 = vcmask 400384
  %2685 = vst.msk [vmem:[%s3] sm:$0xff] %vm2684, %v2605
  %2686 = vst.msk [vmem:[%s3 + $0x8] sm:$0xff] %vm2684, %v2607
  %2687 = vst.msk [vmem:[%s3 + $0x10] sm:$0xff] %vm2684, %v2610
  %2688 = vst.msk [vmem:[%s3 + $0x18] sm:$0xff] %vm2684, %v2612
  %2689 = vst.msk [vmem:[%s3 + $0x20] sm:$0xff] %vm2684, %v2615
  %2690 = vst.msk [vmem:[%s3 + $0x28] sm:$0xff] %vm2684, %v2617
  %2691 = vst.msk [vmem:[%s3 + $0x30] sm:$0xff] %vm2684, %v2620
  %2692 = vst.msk [vmem:[%s3 + $0x38] sm:$0xff] %vm2684, %v2622
  %2693 = vst.msk [vmem:[%s3 + $0x40] sm:$0xff] %vm2684, %v2625
  %2694 = vst.msk [vmem:[%s3 + $0x48] sm:$0xff] %vm2684, %v2627
  %2695 = vst.msk [vmem:[%s3 + $0x50] sm:$0xff] %vm2684, %v2630
  %2696 = vst.msk [vmem:[%s3 + $0x58] sm:$0xff] %vm2684, %v2632
  %2697 = vst.msk [vmem:[%s3 + $0x60] sm:$0xff] %vm2684, %v2635
  %2698 = vst.msk [vmem:[%s3 + $0x68] sm:$0xff] %vm2684, %v2637
  %2699 = vst.msk [vmem:[%s3 + $0x70] sm:$0xff] %vm2684, %v2640
  %2700 = vst.msk [vmem:[%s3 + $0x78] sm:$0xff] %vm2684, %v2642
  %2701 = vst.msk [vmem:[%s3 + $0x80] sm:$0xff] %vm2684, %v2645
  %2702 = vst.msk [vmem:[%s3 + $0x88] sm:$0xff] %vm2684, %v2647
  %2703 = vst.msk [vmem:[%s3 + $0x90] sm:$0xff] %vm2684, %v2650
  %2704 = vst.msk [vmem:[%s3 + $0x98] sm:$0xff] %vm2684, %v2652
  %2705 = vst.msk [vmem:[%s3 + $0xa0] sm:$0xff] %vm2684, %v2655
  %2706 = vst.msk [vmem:[%s3 + $0xa8] sm:$0xff] %vm2684, %v2657
  %2707 = vst.msk [vmem:[%s3 + $0xb0] sm:$0xff] %vm2684, %v2660
  %2708 = vst.msk [vmem:[%s3 + $0xb8] sm:$0xff] %vm2684, %v2662
  %2709 = vst.msk [vmem:[%s3 + $0xc0] sm:$0xff] %vm2684, %v2665
  %2710 = vst.msk [vmem:[%s3 + $0xc8] sm:$0xff] %vm2684, %v2667
  %2711 = vst.msk [vmem:[%s3 + $0xd0] sm:$0xff] %vm2684, %v2670
  %2712 = vst.msk [vmem:[%s3 + $0xd8] sm:$0xff] %vm2684, %v2672
  %2713 = vst.msk [vmem:[%s3 + $0xe0] sm:$0xff] %vm2684, %v2675
  %2714 = vst.msk [vmem:[%s3 + $0xe8] sm:$0xff] %vm2684, %v2677
  %2715 = vst.msk [vmem:[%s3 + $0xf0] sm:$0xff] %vm2684, %v2680
  %2716 = vst.msk [vmem:[%s3 + $0xf8] sm:$0xff] %vm2684, %v2682
  // Predicated region
  $region14: #{sigmoid_mul_conv1x1.1} parent=0 // pred_check
    _
  $region15: #{sigmoid_mul_conv1x1.1} parent=0 // pred_check_branch
    %2718 = sbr.rel (0) target = $region17
  $region16: #{sigmoid_mul_conv1x1.1} parent=0 // pred_region
    _
  $region17: #{sigmoid_mul_conv1x1.1} parent=0 // pred_fallthru
    _
  // Predicated region
  $region18: #{sigmoid_mul_conv1x1.1} parent=0 // pred_check
    _
  $region19: #{sigmoid_mul_conv1x1.1} parent=0 // pred_check_branch
    %2720 = sbr.rel (0) target = $region21
  $region20: #{sigmoid_mul_conv1x1.1} parent=0 // pred_region
    _
  $region21: #{sigmoid_mul_conv1x1.1} parent=0 // pred_fallthru
    _

</llo_original>
